<compile_context>
chip_gen: v7x
topology: tpu7x:2x2x1
jax: 0.10.0
libtpu: 0.0.40
codegen_flags: <defaults>
</compile_context>

<pallas_src>
import functools
import math
import numpy as np
import jax
import jax.numpy as jnp
from jax.experimental import pallas as pl
from jax.experimental.pallas import tpu as pltpu

DILATIONS = (1, 3, 5)  # residual-unit dilations in EncoderBlock


def _elu(x):
    # ELU(alpha=1): x if x > 0 else exp(x) - 1   (min() keeps the untaken branch finite)
    return jnp.where(x > 0, x, jnp.exp(jnp.minimum(x, 0.0)) - 1.0)


def _round_up(x, m):
    return ((x + m - 1) // m) * m


def encoder_block_kernel(x_ref, w1f_ref, b1_ref, w2_ref, b2_ref, wff_ref, bf_ref,
                         o_ref, buf_ref, *, Lpe):
    """One batch chunk (Bc elements) per grid step, batch folded along lanes.

    x_ref   : (Bc, Cin, L)
    w1f_ref : (3, Cin, 3*Cin)  per-unit fused k=3 dilated-conv weight (tap-major columns)
    b1_ref  : (3, Cin, 1)
    w2_ref  : (3, Cin, Cin)    1x1 conv weights
    b2_ref  : (3, Cin, 1)
    wff_ref : (Cout, Kf*Cin)   fused final-conv weight
    bf_ref  : (Cout, 1)
    o_ref   : (Bc, Cout, L)    final conv at every position; wrapper keeps every s-th
    buf_ref : (Cin, Bc*Lpe + 128) VMEM scratch holding the zero-padded activation
    """
    Bc, Cin, L = x_ref.shape
    Kf = wff_ref.shape[1] // Cin
    T = Bc * Lpe
    f32 = jnp.float32

    # Zero the scratch once per grid step (a few vreg stores). This establishes every
    # per-element right-pad region and the tail [T, Tp) that shifted tap reads may touch.
    # Re-done each step, so it stays correct if the "parallel" batch axis is sharded
    # across TensorCores (each core has its own scratch instance).
    buf_ref[...] = jnp.zeros(buf_ref.shape, f32)

    # Stage the input: valid columns only (aligned, lane-dense stores when L % 128 == 0).
    for e in range(Bc):
        buf_ref[:, e * Lpe:e * Lpe + L] = x_ref[e].astype(f32)

    # Register copy of the activation. Invariant kept throughout: buf_ref[:, :T] equals
    # the current activation on valid columns and is ZERO on pad columns, so shifted tap
    # reads never see garbage. The register copy may hold garbage on pad columns (those
    # columns never influence a valid output).
    h = buf_ref[:, :T]

    def stage(act):
        buf_ref[:, :T] = act
        for e in range(Bc):
            buf_ref[:, e * Lpe + L:(e + 1) * Lpe] = jnp.zeros((Cin, Lpe - L), f32)

    def tap_stack(act, n_taps, dilation):
        # tap 0 straight from registers; shifted taps read the zero-padded scratch at
        # lane offset k*dilation (right-padded "causal" conv, stride 1, all taps fused
        # into one sublane-stacked operand for a single MXU matmul).
        if n_taps == 1:
            return act
        views = [act] + [buf_ref[:, pl.ds(k * dilation, T)] for k in range(1, n_taps)]
        return jnp.concatenate(views, axis=0)

    # three ResidualUnits, each followed by ELU (static unroll; per-unit weights are
    # fetched with static ref indexing -> only one weight tile live at a time)
    for i, d in enumerate(DILATIONS):
        a = jnp.dot(w1f_ref[i], tap_stack(h, 3, d),
                    preferred_element_type=f32) + b1_ref[i]      # Conv1d(k=3, dilation=d)
        a = _elu(a)                                              # ELU inside the unit
        a = jnp.dot(w2_ref[i], a, preferred_element_type=f32) + b2_ref[i]  # Conv1d(k=1)
        h = _elu(h + a)                                          # residual add + post-unit ELU
        stage(h)

    # final Conv1d(kernel=Kf, stride=s): evaluated densely here; wrapper keeps every s-th
    # column, which equals the strided conv on the right-padded input.
    # TODO(synk): fold the stride in-kernel via lane-strided scratch reads
    # (pl.ds(k, T//s, stride=s)) once minormost-dim strided loads are relied upon.
    out = jnp.dot(wff_ref[...], tap_stack(h, Kf, 1),
                  preferred_element_type=f32) + bf_ref[...]
    for e in range(Bc):
        o_ref[e] = out[:, e * Lpe:e * Lpe + L].astype(o_ref.dtype)


def encoder_block_pallas(x, kernel_params, stride):
    w1f, b1, w2, b2, wff, bf = kernel_params
    B, Cin, L = x.shape
    Cout = wff.shape[0]
    Kf = wff.shape[1] // Cin

    PAD = max(2 * max(DILATIONS), Kf - 1)      # max right padding any conv needs
    Lpe = _round_up(L + PAD, 128)              # per-element padded slot, lane aligned

    # Fold as many batch elements into the lane dimension as fits a ~1024-lane matmul
    # operand: raises MXU arithmetic intensity and amortises the ~0.35 us per-grid-step
    # cost. (On v7x, B >= 8 still leaves >= 2 "parallel" steps to feed both TensorCores.)
    Bc = 1
    for cand in range(1, B + 1):
        if B % cand == 0 and cand * Lpe <= 1024:
            Bc = cand
    grid = (B // Bc,)
    Tp = Bc * Lpe + 128                        # scratch tail so shifted tap reads stay in-bounds

    # advisory cost estimate for XLA scheduling around the custom call
    flops = B * L * (3 * (2 * 3 * Cin * Cin + 2 * Cin * Cin) + 2 * Kf * Cout * Cin)
    transcendentals = B * 6 * Cin * L
    n_weight_elems = sum(int(np.prod(a.shape)) for a in (w1f, b1, w2, b2, wff, bf))
    bytes_accessed = 4 * (B * Cin * L + B * Cout * L + n_weight_elems)

    def full_spec(a):
        zeros = (0,) * a.ndim
        return pl.BlockSpec(a.shape, lambda b: zeros)

    y_full = pl.pallas_call(
        functools.partial(encoder_block_kernel, Lpe=Lpe),
        out_shape=jax.ShapeDtypeStruct((B, Cout, L), jnp.float32),
        grid_spec=pltpu.PrefetchScalarGridSpec(
            num_scalar_prefetch=0,
            grid=grid,
            in_specs=[
                pl.BlockSpec((Bc, Cin, L), lambda b: (b, 0, 0)),
                full_spec(w1f), full_spec(b1),
                full_spec(w2), full_spec(b2),
                full_spec(wff), full_spec(bf),
            ],
            out_specs=pl.BlockSpec((Bc, Cout, L), lambda b: (b, 0, 0)),
            scratch_shapes=[pltpu.VMEM((Cin, Tp), jnp.float32)],
        ),
        compiler_params=pltpu.CompilerParams(
            dimension_semantics=("parallel",),
        ),
        cost_estimate=pl.CostEstimate(
            flops=flops, transcendentals=transcendentals,
            bytes_accessed=bytes_accessed),
    )(x, w1f, b1, w2, b2, wff, bf)

    if stride != 1:
        # exact wrapper-side subsample of the densely evaluated final conv
        y_full = y_full[:, :, ::stride]
    return y_full


# ---------------- deterministic parameter init (no checkpoint) ----------------

def init_params(key, Cin, Cout, stride):
    Kf = stride * 2 if stride != 1 else 1
    keys = iter(jax.random.split(key, 14))

    def xavier(k, cout, cin, ksz):
        bound = math.sqrt(6.0 / (cin * ksz + cout * ksz))
        return jax.random.uniform(k, (cout, cin, ksz), jnp.float32, -bound, bound)

    def bias_init(k, cout, fan_in):
        bound = 1.0 / math.sqrt(fan_in)
        return jax.random.uniform(k, (cout,), jnp.float32, -bound, bound)

    w1_t, b1_t, w2_t, b2_t = [], [], [], []
    for _ in DILATIONS:
        w1_t.append(xavier(next(keys), Cin, Cin, 3))
        b1_t.append(bias_init(next(keys), Cin, Cin * 3))
        w2_t.append(xavier(next(keys), Cin, Cin, 1))
        b2_t.append(bias_init(next(keys), Cin, Cin * 1))
    wf_t = xavier(next(keys), Cout, Cin, Kf)
    bf_t = bias_init(next(keys), Cout, Cin * Kf)

    torch_layout = (w1_t, b1_t, w2_t, b2_t, wf_t, bf_t)   # (Cout, Cin, K) per conv

    # fused kernel layout: (Cout, K*Cin) with columns grouped tap-major, matching the
    # sublane-stacked (K*Cin, T) operand built in-kernel.
    def fuse_taps(w):
        cout, cin, ksz = w.shape
        return jnp.transpose(w, (0, 2, 1)).reshape(cout, ksz * cin)

    w1f = jnp.stack([fuse_taps(w) for w in w1_t])          # (3, Cin, 3*Cin)
    b1 = jnp.stack([b[:, None] for b in b1_t])             # (3, Cin, 1)
    w2 = jnp.stack([w[:, :, 0] for w in w2_t])             # (3, Cin, Cin)
    b2 = jnp.stack([b[:, None] for b in b2_t])             # (3, Cin, 1)
    wff = fuse_taps(wf_t)                                  # (Cout, Kf*Cin)
    bf = bf_t[:, None]                                     # (Cout, 1)
    kernel_layout = (w1f, b1, w2, b2, wff, bf)
    return torch_layout, kernel_layout


# ---------------- pure-JAX reference (mirrors the PyTorch module) ----------------

def _ref_conv1d(x, w, b, dilation, stride):
    # matches basemodel.Conv1d: right-pad by dilation*(K-1), then dilated conv
    K = w.shape[2]
    pad = dilation * (K - 1)
    xp = jnp.pad(x, ((0, 0), (0, 0), (0, pad)))
    y = jax.lax.conv_general_dilated(
        xp, w, window_strides=(stride,), padding="VALID",
        rhs_dilation=(dilation,), dimension_numbers=("NCH", "OIH", "NCH"))
    return y + b[None, :, None]


def encoder_block_ref(x, torch_params, stride):
    w1_t, b1_t, w2_t, b2_t, wf_t, bf_t = torch_params
    h = x
    for i, d in enumerate(DILATIONS):
        a = _ref_conv1d(h, w1_t[i], b1_t[i], d, 1)
        a = _elu(a)
        a = _ref_conv1d(a, w2_t[i], b2_t[i], 1, 1)
        h = h + a
        h = _elu(h)
    return _ref_conv1d(h, wf_t, bf_t, 1, stride)


if __name__ == "__main__":
    # lane-/sublane-aligned small shapes: Cin multiple of 8, L multiple of 128
    B, Cin, Cout, L, stride = 2, 8, 16, 128, 2

    key = jax.random.PRNGKey(0)
    kx, kp = jax.random.split(key)
    x = jax.random.normal(kx, (B, Cin, L), jnp.float32)
    torch_params, kernel_params = init_params(kp, Cin, Cout, stride)

    y = encoder_block_pallas(x, kernel_params, stride)
    y = jax.block_until_ready(y)

    y_ref = encoder_block_ref(x, torch_params, stride)
    np.testing.assert_allclose(np.asarray(y), np.asarray(y_ref), rtol=2e-3, atol=2e-3)

    print("KERNEL_OK")
</pallas_src>

<mosaic_0001>
module attributes {stable_mosaic.version = 11 : i64} {
  func.func @encoder_block_kernel(%arg0: i32, %arg1: memref<2x8x128xf32, #tpu.memory_space<vmem>>, %arg2: memref<3x8x24xf32, #tpu.memory_space<vmem>>, %arg3: memref<3x8x1xf32, #tpu.memory_space<vmem>>, %arg4: memref<3x8x8xf32, #tpu.memory_space<vmem>>, %arg5: memref<3x8x1xf32, #tpu.memory_space<vmem>>, %arg6: memref<16x32xf32, #tpu.memory_space<vmem>>, %arg7: memref<16x1xf32, #tpu.memory_space<vmem>>, %arg8: memref<2x16x128xf32, #tpu.memory_space<vmem>>, %arg9: memref<8x640xf32, #tpu.memory_space<vmem>>) attributes {dimension_semantics = [#tpu.dimension_semantics<parallel>], iteration_bounds = array<i64: 1>, scalar_prefetch = 0 : i64, scratch_operands = 1 : i64, tpu.core_type = #tpu.core_type<tc>, window_params = [{transform_indices = @transform_0, window_bounds = array<i64: 2, 8, 128>}, {pipeline_mode = #tpu.pipeline_mode<synchronous>, transform_indices = @transform_1, window_bounds = array<i64: 3, 8, 24>}, {pipeline_mode = #tpu.pipeline_mode<synchronous>, transform_indices = @transform_2, window_bounds = array<i64: 3, 8, 1>}, {pipeline_mode = #tpu.pipeline_mode<synchronous>, transform_indices = @transform_3, window_bounds = array<i64: 3, 8, 8>}, {pipeline_mode = #tpu.pipeline_mode<synchronous>, transform_indices = @transform_4, window_bounds = array<i64: 3, 8, 1>}, {pipeline_mode = #tpu.pipeline_mode<synchronous>, transform_indices = @transform_5, window_bounds = array<i64: 16, 32>}, {pipeline_mode = #tpu.pipeline_mode<synchronous>, transform_indices = @transform_6, window_bounds = array<i64: 16, 1>}, {transform_indices = @transform_7, window_bounds = array<i64: 2, 16, 128>}]} {
    %cst = arith.constant 0.000000e+00 : f32
    %0 = vector.broadcast %cst : f32 to vector<8x640xf32>
    %c0 = arith.constant 0 : index
    %c0_0 = arith.constant 0 : index
    %1 = vector.load %arg9[%c0, %c0_0] : memref<8x640xf32, #tpu.memory_space<vmem>>, vector<8x640xf32>
    tpu.vector_store %arg9[%c0, %c0_0], %0 {strides = array<i32>} : memref<8x640xf32, #tpu.memory_space<vmem>>, vector<8x640xf32>,
    %c0_1 = arith.constant 0 : index
    %c0_2 = arith.constant 0 : index
    %c0_3 = arith.constant 0 : index
    %2 = vector.load %arg1[%c0_1, %c0_2, %c0_3] : memref<2x8x128xf32, #tpu.memory_space<vmem>>, vector<1x8x128xf32>
    %3 = vector.shape_cast %2 : vector<1x8x128xf32> to vector<8x128xf32>
    %c0_4 = arith.constant 0 : index
    %c0_5 = arith.constant 0 : index
    %4 = vector.load %arg9[%c0_4, %c0_5] : memref<8x640xf32, #tpu.memory_space<vmem>>, vector<8x128xf32>
    tpu.vector_store %arg9[%c0_4, %c0_5], %3 {strides = array<i32>} : memref<8x640xf32, #tpu.memory_space<vmem>>, vector<8x128xf32>,
    %c1 = arith.constant 1 : index
    %c0_6 = arith.constant 0 : index
    %c0_7 = arith.constant 0 : index
    %5 = vector.load %arg1[%c1, %c0_6, %c0_7] : memref<2x8x128xf32, #tpu.memory_space<vmem>>, vector<1x8x128xf32>
    %6 = vector.shape_cast %5 : vector<1x8x128xf32> to vector<8x128xf32>
    %c0_8 = arith.constant 0 : index
    %c256 = arith.constant 256 : index
    %7 = vector.load %arg9[%c0_8, %c256] : memref<8x640xf32, #tpu.memory_space<vmem>>, vector<8x128xf32>
    tpu.vector_store %arg9[%c0_8, %c256], %6 {strides = array<i32>} : memref<8x640xf32, #tpu.memory_space<vmem>>, vector<8x128xf32>,
    %c0_9 = arith.constant 0 : index
    %c0_10 = arith.constant 0 : index
    %8 = vector.load %arg9[%c0_9, %c0_10] : memref<8x640xf32, #tpu.memory_space<vmem>>, vector<8x512xf32>
    %c0_11 = arith.constant 0 : index
    %c0_12 = arith.constant 0 : index
    %c0_13 = arith.constant 0 : index
    %9 = vector.load %arg2[%c0_11, %c0_12, %c0_13] : memref<3x8x24xf32, #tpu.memory_space<vmem>>, vector<1x8x24xf32>
    %10 = vector.shape_cast %9 : vector<1x8x24xf32> to vector<8x24xf32>
    %c0_14 = arith.constant 0 : index
    %c1_15 = arith.constant 1 : index
    %11 = vector.load %arg9[%c0_14, %c1_15] : memref<8x640xf32, #tpu.memory_space<vmem>>, vector<8x512xf32>
    %c0_16 = arith.constant 0 : index
    %c2 = arith.constant 2 : index
    %12 = vector.load %arg9[%c0_16, %c2] : memref<8x640xf32, #tpu.memory_space<vmem>>, vector<8x512xf32>
    %13 = tpu.concatenate %8, %11, %12 in 0 : vector<8x512xf32>, vector<8x512xf32>, vector<8x512xf32> -> vector<24x512xf32>
    %cst_17 = arith.constant dense<0.000000e+00> : vector<8x512xf32>
    %14 = tpu.matmul %10, %13, %cst_17 {dimension_numbers = #tpu.dot_dimension_numbers<[1], [0], [0], [1], [0, 0, 1, 1], [], []>} : vector<8x24xf32>, vector<24x512xf32>, vector<8x512xf32> -> vector<8x512xf32>
    %c0_18 = arith.constant 0 : index
    %c0_19 = arith.constant 0 : index
    %c0_20 = arith.constant 0 : index
    %15 = vector.load %arg3[%c0_18, %c0_19, %c0_20] : memref<3x8x1xf32, #tpu.memory_space<vmem>>, vector<1x8x1xf32>
    %16 = vector.shape_cast %15 : vector<1x8x1xf32> to vector<8x1xf32>
    %17 = vector.broadcast %16 : vector<8x1xf32> to vector<8x512xf32>
    %18 = arith.addf %14, %17 : vector<8x512xf32>
    %cst_21 = arith.constant 0.000000e+00 : f32
    %19 = vector.broadcast %cst_21 : f32 to vector<8x512xf32>
    %20 = arith.cmpf ogt, %18, %19 : vector<8x512xf32>
    %cst_22 = arith.constant 0.000000e+00 : f32
    %21 = vector.broadcast %cst_22 : f32 to vector<8x512xf32>
    %22 = arith.minimumf %18, %21 : vector<8x512xf32>
    %23 = math.exp %22 : vector<8x512xf32>
    %cst_23 = arith.constant 1.000000e+00 : f32
    %24 = vector.broadcast %cst_23 : f32 to vector<8x512xf32>
    %25 = arith.subf %23, %24 : vector<8x512xf32>
    %26 = arith.select %20, %18, %25 : vector<8x512xi1>, vector<8x512xf32>
    %c0_24 = arith.constant 0 : index
    %c0_25 = arith.constant 0 : index
    %c0_26 = arith.constant 0 : index
    %27 = vector.load %arg4[%c0_24, %c0_25, %c0_26] : memref<3x8x8xf32, #tpu.memory_space<vmem>>, vector<1x8x8xf32>
    %28 = vector.shape_cast %27 : vector<1x8x8xf32> to vector<8x8xf32>
    %cst_27 = arith.constant dense<0.000000e+00> : vector<8x512xf32>
    %29 = tpu.matmul %28, %26, %cst_27 {dimension_numbers = #tpu.dot_dimension_numbers<[1], [0], [0], [1], [0, 0, 1, 1], [], []>} : vector<8x8xf32>, vector<8x512xf32>, vector<8x512xf32> -> vector<8x512xf32>
    %c0_28 = arith.constant 0 : index
    %c0_29 = arith.constant 0 : index
    %c0_30 = arith.constant 0 : index
    %30 = vector.load %arg5[%c0_28, %c0_29, %c0_30] : memref<3x8x1xf32, #tpu.memory_space<vmem>>, vector<1x8x1xf32>
    %31 = vector.shape_cast %30 : vector<1x8x1xf32> to vector<8x1xf32>
    %32 = vector.broadcast %31 : vector<8x1xf32> to vector<8x512xf32>
    %33 = arith.addf %29, %32 : vector<8x512xf32>
    %34 = arith.addf %8, %33 : vector<8x512xf32>
    %cst_31 = arith.constant 0.000000e+00 : f32
    %35 = vector.broadcast %cst_31 : f32 to vector<8x512xf32>
    %36 = arith.cmpf ogt, %34, %35 : vector<8x512xf32>
    %cst_32 = arith.constant 0.000000e+00 : f32
    %37 = vector.broadcast %cst_32 : f32 to vector<8x512xf32>
    %38 = arith.minimumf %34, %37 : vector<8x512xf32>
    %39 = math.exp %38 : vector<8x512xf32>
    %cst_33 = arith.constant 1.000000e+00 : f32
    %40 = vector.broadcast %cst_33 : f32 to vector<8x512xf32>
    %41 = arith.subf %39, %40 : vector<8x512xf32>
    %42 = arith.select %36, %34, %41 : vector<8x512xi1>, vector<8x512xf32>
    %c0_34 = arith.constant 0 : index
    %c0_35 = arith.constant 0 : index
    %43 = vector.load %arg9[%c0_34, %c0_35] : memref<8x640xf32, #tpu.memory_space<vmem>>, vector<8x512xf32>
    tpu.vector_store %arg9[%c0_34, %c0_35], %42 {strides = array<i32>} : memref<8x640xf32, #tpu.memory_space<vmem>>, vector<8x512xf32>,
    %cst_36 = arith.constant 0.000000e+00 : f32
    %44 = vector.broadcast %cst_36 : f32 to vector<8x128xf32>
    %c0_37 = arith.constant 0 : index
    %c128 = arith.constant 128 : index
    %45 = vector.load %arg9[%c0_37, %c128] : memref<8x640xf32, #tpu.memory_space<vmem>>, vector<8x128xf32>
    tpu.vector_store %arg9[%c0_37, %c128], %44 {strides = array<i32>} : memref<8x640xf32, #tpu.memory_space<vmem>>, vector<8x128xf32>,
    %cst_38 = arith.constant 0.000000e+00 : f32
    %46 = vector.broadcast %cst_38 : f32 to vector<8x128xf32>
    %c0_39 = arith.constant 0 : index
    %c384 = arith.constant 384 : index
    %47 = vector.load %arg9[%c0_39, %c384] : memref<8x640xf32, #tpu.memory_space<vmem>>, vector<8x128xf32>
    tpu.vector_store %arg9[%c0_39, %c384], %46 {strides = array<i32>} : memref<8x640xf32, #tpu.memory_space<vmem>>, vector<8x128xf32>,
    %c1_40 = arith.constant 1 : index
    %c0_41 = arith.constant 0 : index
    %c0_42 = arith.constant 0 : index
    %48 = vector.load %arg2[%c1_40, %c0_41, %c0_42] : memref<3x8x24xf32, #tpu.memory_space<vmem>>, vector<1x8x24xf32>
    %49 = vector.shape_cast %48 : vector<1x8x24xf32> to vector<8x24xf32>
    %c0_43 = arith.constant 0 : index
    %c3 = arith.constant 3 : index
    %50 = vector.load %arg9[%c0_43, %c3] : memref<8x640xf32, #tpu.memory_space<vmem>>, vector<8x512xf32>
    %c0_44 = arith.constant 0 : index
    %c6 = arith.constant 6 : index
    %51 = vector.load %arg9[%c0_44, %c6] : memref<8x640xf32, #tpu.memory_space<vmem>>, vector<8x512xf32>
    %52 = tpu.concatenate %42, %50, %51 in 0 : vector<8x512xf32>, vector<8x512xf32>, vector<8x512xf32> -> vector<24x512xf32>
    %cst_45 = arith.constant dense<0.000000e+00> : vector<8x512xf32>
    %53 = tpu.matmul %49, %52, %cst_45 {dimension_numbers = #tpu.dot_dimension_numbers<[1], [0], [0], [1], [0, 0, 1, 1], [], []>} : vector<8x24xf32>, vector<24x512xf32>, vector<8x512xf32> -> vector<8x512xf32>
    %c1_46 = arith.constant 1 : index
    %c0_47 = arith.constant 0 : index
    %c0_48 = arith.constant 0 : index
    %54 = vector.load %arg3[%c1_46, %c0_47, %c0_48] : memref<3x8x1xf32, #tpu.memory_space<vmem>>, vector<1x8x1xf32>
    %55 = vector.shape_cast %54 : vector<1x8x1xf32> to vector<8x1xf32>
    %56 = vector.broadcast %55 : vector<8x1xf32> to vector<8x512xf32>
    %57 = arith.addf %53, %56 : vector<8x512xf32>
    %cst_49 = arith.constant 0.000000e+00 : f32
    %58 = vector.broadcast %cst_49 : f32 to vector<8x512xf32>
    %59 = arith.cmpf ogt, %57, %58 : vector<8x512xf32>
    %cst_50 = arith.constant 0.000000e+00 : f32
    %60 = vector.broadcast %cst_50 : f32 to vector<8x512xf32>
    %61 = arith.minimumf %57, %60 : vector<8x512xf32>
    %62 = math.exp %61 : vector<8x512xf32>
    %cst_51 = arith.constant 1.000000e+00 : f32
    %63 = vector.broadcast %cst_51 : f32 to vector<8x512xf32>
    %64 = arith.subf %62, %63 : vector<8x512xf32>
    %65 = arith.select %59, %57, %64 : vector<8x512xi1>, vector<8x512xf32>
    %c1_52 = arith.constant 1 : index
    %c0_53 = arith.constant 0 : index
    %c0_54 = arith.constant 0 : index
    %66 = vector.load %arg4[%c1_52, %c0_53, %c0_54] : memref<3x8x8xf32, #tpu.memory_space<vmem>>, vector<1x8x8xf32>
    %67 = vector.shape_cast %66 : vector<1x8x8xf32> to vector<8x8xf32>
    %cst_55 = arith.constant dense<0.000000e+00> : vector<8x512xf32>
    %68 = tpu.matmul %67, %65, %cst_55 {dimension_numbers = #tpu.dot_dimension_numbers<[1], [0], [0], [1], [0, 0, 1, 1], [], []>} : vector<8x8xf32>, vector<8x512xf32>, vector<8x512xf32> -> vector<8x512xf32>
    %c1_56 = arith.constant 1 : index
    %c0_57 = arith.constant 0 : index
    %c0_58 = arith.constant 0 : index
    %69 = vector.load %arg5[%c1_56, %c0_57, %c0_58] : memref<3x8x1xf32, #tpu.memory_space<vmem>>, vector<1x8x1xf32>
    %70 = vector.shape_cast %69 : vector<1x8x1xf32> to vector<8x1xf32>
    %71 = vector.broadcast %70 : vector<8x1xf32> to vector<8x512xf32>
    %72 = arith.addf %68, %71 : vector<8x512xf32>
    %73 = arith.addf %42, %72 : vector<8x512xf32>
    %cst_59 = arith.constant 0.000000e+00 : f32
    %74 = vector.broadcast %cst_59 : f32 to vector<8x512xf32>
    %75 = arith.cmpf ogt, %73, %74 : vector<8x512xf32>
    %cst_60 = arith.constant 0.000000e+00 : f32
    %76 = vector.broadcast %cst_60 : f32 to vector<8x512xf32>
    %77 = arith.minimumf %73, %76 : vector<8x512xf32>
    %78 = math.exp %77 : vector<8x512xf32>
    %cst_61 = arith.constant 1.000000e+00 : f32
    %79 = vector.broadcast %cst_61 : f32 to vector<8x512xf32>
    %80 = arith.subf %78, %79 : vector<8x512xf32>
    %81 = arith.select %75, %73, %80 : vector<8x512xi1>, vector<8x512xf32>
    %c0_62 = arith.constant 0 : index
    %c0_63 = arith.constant 0 : index
    %82 = vector.load %arg9[%c0_62, %c0_63] : memref<8x640xf32, #tpu.memory_space<vmem>>, vector<8x512xf32>
    tpu.vector_store %arg9[%c0_62, %c0_63], %81 {strides = array<i32>} : memref<8x640xf32, #tpu.memory_space<vmem>>, vector<8x512xf32>,
    %cst_64 = arith.constant 0.000000e+00 : f32
    %83 = vector.broadcast %cst_64 : f32 to vector<8x128xf32>
    %c0_65 = arith.constant 0 : index
    %c128_66 = arith.constant 128 : index
    %84 = vector.load %arg9[%c0_65, %c128_66] : memref<8x640xf32, #tpu.memory_space<vmem>>, vector<8x128xf32>
    tpu.vector_store %arg9[%c0_65, %c128_66], %83 {strides = array<i32>} : memref<8x640xf32, #tpu.memory_space<vmem>>, vector<8x128xf32>,
    %cst_67 = arith.constant 0.000000e+00 : f32
    %85 = vector.broadcast %cst_67 : f32 to vector<8x128xf32>
    %c0_68 = arith.constant 0 : index
    %c384_69 = arith.constant 384 : index
    %86 = vector.load %arg9[%c0_68, %c384_69] : memref<8x640xf32, #tpu.memory_space<vmem>>, vector<8x128xf32>
    tpu.vector_store %arg9[%c0_68, %c384_69], %85 {strides = array<i32>} : memref<8x640xf32, #tpu.memory_space<vmem>>, vector<8x128xf32>,
    %c2_70 = arith.constant 2 : index
    %c0_71 = arith.constant 0 : index
    %c0_72 = arith.constant 0 : index
    %87 = vector.load %arg2[%c2_70, %c0_71, %c0_72] : memref<3x8x24xf32, #tpu.memory_space<vmem>>, vector<1x8x24xf32>
    %88 = vector.shape_cast %87 : vector<1x8x24xf32> to vector<8x24xf32>
    %c0_73 = arith.constant 0 : index
    %c5 = arith.constant 5 : index
    %89 = vector.load %arg9[%c0_73, %c5] : memref<8x640xf32, #tpu.memory_space<vmem>>, vector<8x512xf32>
    %c0_74 = arith.constant 0 : index
    %c10 = arith.constant 10 : index
    %90 = vector.load %arg9[%c0_74, %c10] : memref<8x640xf32, #tpu.memory_space<vmem>>, vector<8x512xf32>
    %91 = tpu.concatenate %81, %89, %90 in 0 : vector<8x512xf32>, vector<8x512xf32>, vector<8x512xf32> -> vector<24x512xf32>
    %cst_75 = arith.constant dense<0.000000e+00> : vector<8x512xf32>
    %92 = tpu.matmul %88, %91, %cst_75 {dimension_numbers = #tpu.dot_dimension_numbers<[1], [0], [0], [1], [0, 0, 1, 1], [], []>} : vector<8x24xf32>, vector<24x512xf32>, vector<8x512xf32> -> vector<8x512xf32>
    %c2_76 = arith.constant 2 : index
    %c0_77 = arith.constant 0 : index
    %c0_78 = arith.constant 0 : index
    %93 = vector.load %arg3[%c2_76, %c0_77, %c0_78] : memref<3x8x1xf32, #tpu.memory_space<vmem>>, vector<1x8x1xf32>
    %94 = vector.shape_cast %93 : vector<1x8x1xf32> to vector<8x1xf32>
    %95 = vector.broadcast %94 : vector<8x1xf32> to vector<8x512xf32>
    %96 = arith.addf %92, %95 : vector<8x512xf32>
    %cst_79 = arith.constant 0.000000e+00 : f32
    %97 = vector.broadcast %cst_79 : f32 to vector<8x512xf32>
    %98 = arith.cmpf ogt, %96, %97 : vector<8x512xf32>
    %cst_80 = arith.constant 0.000000e+00 : f32
    %99 = vector.broadcast %cst_80 : f32 to vector<8x512xf32>
    %100 = arith.minimumf %96, %99 : vector<8x512xf32>
    %101 = math.exp %100 : vector<8x512xf32>
    %cst_81 = arith.constant 1.000000e+00 : f32
    %102 = vector.broadcast %cst_81 : f32 to vector<8x512xf32>
    %103 = arith.subf %101, %102 : vector<8x512xf32>
    %104 = arith.select %98, %96, %103 : vector<8x512xi1>, vector<8x512xf32>
    %c2_82 = arith.constant 2 : index
    %c0_83 = arith.constant 0 : index
    %c0_84 = arith.constant 0 : index
    %105 = vector.load %arg4[%c2_82, %c0_83, %c0_84] : memref<3x8x8xf32, #tpu.memory_space<vmem>>, vector<1x8x8xf32>
    %106 = vector.shape_cast %105 : vector<1x8x8xf32> to vector<8x8xf32>
    %cst_85 = arith.constant dense<0.000000e+00> : vector<8x512xf32>
    %107 = tpu.matmul %106, %104, %cst_85 {dimension_numbers = #tpu.dot_dimension_numbers<[1], [0], [0], [1], [0, 0, 1, 1], [], []>} : vector<8x8xf32>, vector<8x512xf32>, vector<8x512xf32> -> vector<8x512xf32>
    %c2_86 = arith.constant 2 : index
    %c0_87 = arith.constant 0 : index
    %c0_88 = arith.constant 0 : index
    %108 = vector.load %arg5[%c2_86, %c0_87, %c0_88] : memref<3x8x1xf32, #tpu.memory_space<vmem>>, vector<1x8x1xf32>
    %109 = vector.shape_cast %108 : vector<1x8x1xf32> to vector<8x1xf32>
    %110 = vector.broadcast %109 : vector<8x1xf32> to vector<8x512xf32>
    %111 = arith.addf %107, %110 : vector<8x512xf32>
    %112 = arith.addf %81, %111 : vector<8x512xf32>
    %cst_89 = arith.constant 0.000000e+00 : f32
    %113 = vector.broadcast %cst_89 : f32 to vector<8x512xf32>
    %114 = arith.cmpf ogt, %112, %113 : vector<8x512xf32>
    %cst_90 = arith.constant 0.000000e+00 : f32
    %115 = vector.broadcast %cst_90 : f32 to vector<8x512xf32>
    %116 = arith.minimumf %112, %115 : vector<8x512xf32>
    %117 = math.exp %116 : vector<8x512xf32>
    %cst_91 = arith.constant 1.000000e+00 : f32
    %118 = vector.broadcast %cst_91 : f32 to vector<8x512xf32>
    %119 = arith.subf %117, %118 : vector<8x512xf32>
    %120 = arith.select %114, %112, %119 : vector<8x512xi1>, vector<8x512xf32>
    %c0_92 = arith.constant 0 : index
    %c0_93 = arith.constant 0 : index
    %121 = vector.load %arg9[%c0_92, %c0_93] : memref<8x640xf32, #tpu.memory_space<vmem>>, vector<8x512xf32>
    tpu.vector_store %arg9[%c0_92, %c0_93], %120 {strides = array<i32>} : memref<8x640xf32, #tpu.memory_space<vmem>>, vector<8x512xf32>,
    %cst_94 = arith.constant 0.000000e+00 : f32
    %122 = vector.broadcast %cst_94 : f32 to vector<8x128xf32>
    %c0_95 = arith.constant 0 : index
    %c128_96 = arith.constant 128 : index
    %123 = vector.load %arg9[%c0_95, %c128_96] : memref<8x640xf32, #tpu.memory_space<vmem>>, vector<8x128xf32>
    tpu.vector_store %arg9[%c0_95, %c128_96], %122 {strides = array<i32>} : memref<8x640xf32, #tpu.memory_space<vmem>>, vector<8x128xf32>,
    %cst_97 = arith.constant 0.000000e+00 : f32
    %124 = vector.broadcast %cst_97 : f32 to vector<8x128xf32>
    %c0_98 = arith.constant 0 : index
    %c384_99 = arith.constant 384 : index
    %125 = vector.load %arg9[%c0_98, %c384_99] : memref<8x640xf32, #tpu.memory_space<vmem>>, vector<8x128xf32>
    tpu.vector_store %arg9[%c0_98, %c384_99], %124 {strides = array<i32>} : memref<8x640xf32, #tpu.memory_space<vmem>>, vector<8x128xf32>,
    %c0_100 = arith.constant 0 : index
    %c0_101 = arith.constant 0 : index
    %126 = vector.load %arg6[%c0_100, %c0_101] : memref<16x32xf32, #tpu.memory_space<vmem>>, vector<16x32xf32>
    %c0_102 = arith.constant 0 : index
    %c1_103 = arith.constant 1 : index
    %127 = vector.load %arg9[%c0_102, %c1_103] : memref<8x640xf32, #tpu.memory_space<vmem>>, vector<8x512xf32>
    %c0_104 = arith.constant 0 : index
    %c2_105 = arith.constant 2 : index
    %128 = vector.load %arg9[%c0_104, %c2_105] : memref<8x640xf32, #tpu.memory_space<vmem>>, vector<8x512xf32>
    %c0_106 = arith.constant 0 : index
    %c3_107 = arith.constant 3 : index
    %129 = vector.load %arg9[%c0_106, %c3_107] : memref<8x640xf32, #tpu.memory_space<vmem>>, vector<8x512xf32>
    %130 = tpu.concatenate %120, %127, %128, %129 in 0 : vector<8x512xf32>, vector<8x512xf32>, vector<8x512xf32>, vector<8x512xf32> -> vector<32x512xf32>
    %cst_108 = arith.constant dense<0.000000e+00> : vector<16x512xf32>
    %131 = tpu.matmul %126, %130, %cst_108 {dimension_numbers = #tpu.dot_dimension_numbers<[1], [0], [0], [1], [0, 0, 1, 1], [], []>} : vector<16x32xf32>, vector<32x512xf32>, vector<16x512xf32> -> vector<16x512xf32>
    %c0_109 = arith.constant 0 : index
    %c0_110 = arith.constant 0 : index
    %132 = vector.load %arg7[%c0_109, %c0_110] : memref<16x1xf32, #tpu.memory_space<vmem>>, vector<16x1xf32>
    %133 = vector.broadcast %132 : vector<16x1xf32> to vector<16x512xf32>
    %134 = arith.addf %131, %133 : vector<16x512xf32>
    %135 = vector.extract_strided_slice %134 {offsets = [0, 0], sizes = [16, 128], strides = [1, 1]} : vector<16x512xf32> to vector<16x128xf32>
    %c0_111 = arith.constant 0 : index
    %c0_112 = arith.constant 0 : index
    %c0_113 = arith.constant 0 : index
    %136 = vector.load %arg8[%c0_111, %c0_112, %c0_113] : memref<2x16x128xf32, #tpu.memory_space<vmem>>, vector<1x16x128xf32>
    %137 = vector.shape_cast %136 : vector<1x16x128xf32> to vector<16x128xf32>
    %138 = vector.shape_cast %135 : vector<16x128xf32> to vector<1x16x128xf32>
    tpu.vector_store %arg8[%c0_111, %c0_112, %c0_113], %138 {strides = array<i32>} : memref<2x16x128xf32, #tpu.memory_space<vmem>>, vector<1x16x128xf32>,
    %139 = vector.extract_strided_slice %134 {offsets = [0, 256], sizes = [16, 128], strides = [1, 1]} : vector<16x512xf32> to vector<16x128xf32>
    %c1_114 = arith.constant 1 : index
    %c0_115 = arith.constant 0 : index
    %c0_116 = arith.constant 0 : index
    %140 = vector.load %arg8[%c1_114, %c0_115, %c0_116] : memref<2x16x128xf32, #tpu.memory_space<vmem>>, vector<1x16x128xf32>
    %141 = vector.shape_cast %140 : vector<1x16x128xf32> to vector<16x128xf32>
    %142 = vector.shape_cast %139 : vector<16x128xf32> to vector<1x16x128xf32>
    tpu.vector_store %arg8[%c1_114, %c0_115, %c0_116], %142 {strides = array<i32>} : memref<2x16x128xf32, #tpu.memory_space<vmem>>, vector<1x16x128xf32>,
    return
  }
  func.func @transform_0(%arg0: i32) -> (i32, i32, i32) {
    %c0_i32 = arith.constant 0 : i32
    %c0_i32_0 = arith.constant 0 : i32
    %c0_i32_1 = arith.constant 0 : i32
    return %arg0, %c0_i32, %c0_i32_0 : i32, i32, i32
  }
  func.func @transform_1(%arg0: i32) -> (i32, i32, i32) {
    %c0_i32 = arith.constant 0 : i32
    %c0_i32_0 = arith.constant 0 : i32
    %c0_i32_1 = arith.constant 0 : i32
    %c0_i32_2 = arith.constant 0 : i32
    return %c0_i32, %c0_i32_0, %c0_i32_1 : i32, i32, i32
  }
  func.func @transform_2(%arg0: i32) -> (i32, i32, i32) {
    %c0_i32 = arith.constant 0 : i32
    %c0_i32_0 = arith.constant 0 : i32
    %c0_i32_1 = arith.constant 0 : i32
    %c0_i32_2 = arith.constant 0 : i32
    return %c0_i32, %c0_i32_0, %c0_i32_1 : i32, i32, i32
  }
  func.func @transform_3(%arg0: i32) -> (i32, i32, i32) {
    %c0_i32 = arith.constant 0 : i32
    %c0_i32_0 = arith.constant 0 : i32
    %c0_i32_1 = arith.constant 0 : i32
    %c0_i32_2 = arith.constant 0 : i32
    return %c0_i32, %c0_i32_0, %c0_i32_1 : i32, i32, i32
  }
  func.func @transform_4(%arg0: i32) -> (i32, i32, i32) {
    %c0_i32 = arith.constant 0 : i32
    %c0_i32_0 = arith.constant 0 : i32
    %c0_i32_1 = arith.constant 0 : i32
    %c0_i32_2 = arith.constant 0 : i32
    return %c0_i32, %c0_i32_0, %c0_i32_1 : i32, i32, i32
  }
  func.func @transform_5(%arg0: i32) -> (i32, i32) {
    %c0_i32 = arith.constant 0 : i32
    %c0_i32_0 = arith.constant 0 : i32
    %c0_i32_1 = arith.constant 0 : i32
    return %c0_i32, %c0_i32_0 : i32, i32
  }
  func.func @transform_6(%arg0: i32) -> (i32, i32) {
    %c0_i32 = arith.constant 0 : i32
    %c0_i32_0 = arith.constant 0 : i32
    %c0_i32_1 = arith.constant 0 : i32
    return %c0_i32, %c0_i32_0 : i32, i32
  }
  func.func @transform_7(%arg0: i32) -> (i32, i32, i32) {
    %c0_i32 = arith.constant 0 : i32
    %c0_i32_0 = arith.constant 0 : i32
    %c0_i32_1 = arith.constant 0 : i32
    return %arg0, %c0_i32, %c0_i32_0 : i32, i32, i32
  }
}

</mosaic_0001>

<llo_original>
// kernel: tpu_custom_call.1
$region0: #{tpu_custom_call.1}
  #allocation0 [shape = 'u32[]', space=smem, size = 0x4, offset = 0x4, fixed_abs, tag = 'smem constant byte address 0x4 - core index']
  #allocation1 [shape = 'u32[144,128]{1,0:T(1,128)}', space=vmem, size = 0x12000, scoped, tag = 'internal scratch']
  #allocation2 [shape = 'f32[8,640]{1,0:T(8,128)}', space=vmem, size = 0x5000, scoped, tag = 'scratch operand']
  %s0 = inlined_call_operand.vmem [shape: f32[2,8,128], index: 0, kind: input, shape index: {}]
  %s1 = inlined_call_operand.vmem [shape: f32[3,8,24], index: 1, kind: input, shape index: {}]
  %s2 = inlined_call_operand.vmem [shape: f32[3,8,1], index: 2, kind: input, shape index: {}]
  %s3 = inlined_call_operand.vmem [shape: f32[3,8,8], index: 3, kind: input, shape index: {}]
  %s4 = inlined_call_operand.vmem [shape: f32[3,8,1], index: 4, kind: input, shape index: {}]
  %s5 = inlined_call_operand.vmem [shape: f32[16,32], index: 5, kind: input, shape index: {}]
  %s6 = inlined_call_operand.vmem [shape: f32[16,1], index: 6, kind: input, shape index: {}]
  %s7 = inlined_call_operand.hbm [shape: f32[2,16,128], index: 7, kind: output, shape index: {}]
  %s8 = sld [smem:[#allocation0]]
  $region38: #{tpu_custom_call.1} parent=0
    _
  %s10 = ssub.s32 1, %s8
  %s11 = scalar_select 0, %s10, %s8
  $region1: #{tpu_custom_call.1} parent=0
    #allocation3 [shape = 'u8[16384]{0}', space=vmem, size = 0x4000, scoped, tag = 'output window, operand 0, single buffered']
    #allocation4 [shape = 's32[1]{0}', space=sflag, size = 0x4, scoped, tag = 'scoped memory for tpu_custom_call.1']
    %12 = vsyncpa [#allocation4], 0
    // Predicated region
    $region2: #{tpu_custom_call.1} parent=1 // pred_check
      _
    $region3: #{tpu_custom_call.1} parent=1 // pred_check_branch
      %14 = sbr.rel (0) target = $region5
    $region4: #{tpu_custom_call.1} parent=1 // pred_region
      _
    $region5: #{tpu_custom_call.1} parent=1 // pred_fallthru
      _
    // Predicated region
    $region6: #{tpu_custom_call.1} parent=1 // pred_check
      _
    $region7: #{tpu_custom_call.1} parent=1 // pred_check_branch
      %16 = sbr.rel (0) target = $region9
    $region8: #{tpu_custom_call.1} parent=1 // pred_region
      _
    $region9: #{tpu_custom_call.1} parent=1 // pred_fallthru
      _
    // Predicated region
    $region10: #{tpu_custom_call.1} parent=1 // pred_check
      _
    $region11: #{tpu_custom_call.1} parent=1 // pred_check_branch
      %18 = sbr.rel (0) target = $region13
    $region12: #{tpu_custom_call.1} parent=1 // pred_region
      _
    $region13: #{tpu_custom_call.1} parent=1 // pred_fallthru
      _
    // Predicated region
    $region14: #{tpu_custom_call.1} parent=1 // pred_check
      _
    $region15: #{tpu_custom_call.1} parent=1 // pred_check_branch
      %20 = sbr.rel (0) target = $region17
    $region16: #{tpu_custom_call.1} parent=1 // pred_region
      _
    $region17: #{tpu_custom_call.1} parent=1 // pred_fallthru
      _
    // Predicated region
    $region18: #{tpu_custom_call.1} parent=1 // pred_check
      _
    $region19: #{tpu_custom_call.1} parent=1 // pred_check_branch
      %22 = sbr.rel (0) target = $region21
    $region20: #{tpu_custom_call.1} parent=1 // pred_region
      _
    $region21: #{tpu_custom_call.1} parent=1 // pred_fallthru
      _
    // Predicated region
    $region22: #{tpu_custom_call.1} parent=1 // pred_check
      _
    $region23: #{tpu_custom_call.1} parent=1 // pred_check_branch
      %24 = sbr.rel (0) target = $region25
    $region24: #{tpu_custom_call.1} parent=1 // pred_region
      _
    $region25: #{tpu_custom_call.1} parent=1 // pred_fallthru
      _
    // Predicated region
    $region26: #{tpu_custom_call.1} parent=1 // pred_check
      _
    $region27: #{tpu_custom_call.1} parent=1 // pred_check_branch
      %26 = sbr.rel (0) target = $region29
    $region28: #{tpu_custom_call.1} parent=1 // pred_region
      _
    $region29: #{tpu_custom_call.1} parent=1 // pred_fallthru
      _
    %27 = vst [vmem:[#allocation2] sm:$0xff] 0.0
    %28 = vst [vmem:[#allocation2 + $0x8] sm:$0xff] 0.0
    %29 = vst [vmem:[#allocation2 + $0x10] sm:$0xff] 0.0
    %30 = vst [vmem:[#allocation2 + $0x18] sm:$0xff] 0.0
    %31 = vst [vmem:[#allocation2 + $0x20] sm:$0xff] 0.0
    %v32 = vld [vmem:[%s0] sm:$0xff]
    %33 = vst [vmem:[#allocation2] sm:$0xff] %v32
    %s34 = scalar_lea.vmem %s0, 8
    %v35 = vld [vmem:[%s34] sm:$0xff]
    %36 = vst [vmem:[#allocation2 + $0x10] sm:$0xff] %v35
    %v37 = vld [vmem:[#allocation2] sm:$0xff]
    %v38 = vld [vmem:[#allocation2 + $0x8] sm:$0xff]
    %v39 = vld [vmem:[#allocation2 + $0x10] sm:$0xff]
    %v40 = vld [vmem:[#allocation2 + $0x18] sm:$0xff]
    %v41 = vld [vmem:[%s1] sm:$0xff]
    %v42 = vld [vmem:[#allocation2] sm:$0xff]
    %v43 = vld [vmem:[#allocation2 + $0x8] sm:$0xff]
    %v44 = vld [vmem:[#allocation2 + $0x10] sm:$0xff]
    %v45 = vld [vmem:[#allocation2 + $0x18] sm:$0xff]
    %v46 = vld [vmem:[#allocation2 + $0x20] sm:$0xff]
    %52 = vrot.lane.b32.xlu0 %v42, 127
    %v53 = vpop.permute.xlu0 %52
    %54 = vrot.lane.b32.xlu0 %v43, 127
    %v55 = vpop.permute.xlu0 %54
    %56 = vrot.lane.b32.xlu0 %v44, 127
    %v57 = vpop.permute.xlu0 %56
    %58 = vrot.lane.b32.xlu0 %v45, 127
    %v59 = vpop.permute.xlu0 %58
    %60 = vrot.lane.b32.xlu0 %v46, 127
    %v61 = vpop.permute.xlu0 %60
    %vm62 = vcmask 1039360
    %v63 = vsel %vm62, %v53, %v55
    %v64 = vsel %vm62, %v55, %v57
    %v65 = vsel %vm62, %v57, %v59
    %v66 = vsel %vm62, %v59, %v61
    %71 = vrot.lane.b32.xlu0 %v42, 126
    %v72 = vpop.permute.xlu0 %71
    %73 = vrot.lane.b32.xlu0 %v43, 126
    %v74 = vpop.permute.xlu0 %73
    %75 = vrot.lane.b32.xlu0 %v44, 126
    %v76 = vpop.permute.xlu0 %75
    %77 = vrot.lane.b32.xlu0 %v45, 126
    %v78 = vpop.permute.xlu0 %77
    %79 = vrot.lane.b32.xlu0 %v46, 126
    %v80 = vpop.permute.xlu0 %79
    %vm81 = vcmask 1031168
    %v82 = vsel %vm81, %v72, %v74
    %v83 = vsel %vm81, %v74, %v76
    %v84 = vsel %vm81, %v76, %v78
    %v85 = vsel %vm81, %v78, %v80
    %v90 = vld [vmem:[%s2] sm:$0xff]
    %92 = vset.pattern.permute.xlu0 0
    %93 = vperm.xlu0 %92, %v90
    %v94 = vpop.permute.xlu0 %93
    %vm96 = vcmask 195584
    %v98 = vsel %vm96, %v41, 0
    %100 = vmatprep.subr.mxu0 %v38
    %101 = vmatpush1.msra.mxu0 %v37
    %102 = vmatprep.subr.mxu0 %v64
    %103 = vmatpush1.msra.mxu0 %v63
    %104 = vmatprep.subr.mxu0 %v83
    %105 = vmatpush1.msra.mxu0 %v82
    %106 = vmatprep.subr.mxu0 0.0
    %107 = vmatpush1.msra.mxu0 0.0
    %108 = vmatprep.subr.mxu0 0.0
    %109 = vmatpush1.msra.mxu0 0.0
    %110 = vmatprep.subr.mxu0 0.0
    %111 = vmatpush1.msra.mxu0 0.0
    %112 = vmatprep.subr.mxu0 0.0
    %113 = vmatpush1.msra.mxu0 0.0
    %114 = vmatprep.subr.mxu0 0.0
    %115 = vmatpush1.msra.mxu0 0.0
    %116 = vmatprep.subr.mxu0 0.0
    %117 = vmatpush1.msra.mxu0 0.0
    %118 = vmatprep.subr.mxu0 0.0
    %119 = vmatpush1.msra.mxu0 0.0
    %120 = vmatprep.subr.mxu0 0.0
    %121 = vmatpush1.msra.mxu0 0.0
    %122 = vmatprep.subr.mxu0 0.0
    %123 = vmatpush1.msra.mxu0 0.0
    %124 = vmatprep.subr.mxu0 0.0
    %125 = vmatpush1.msra.mxu0 0.0
    %126 = vmatprep.subr.mxu0 0.0
    %127 = vmatpush1.msra.mxu0 0.0
    %128 = vmatprep.subr.mxu0 0.0
    %129 = vmatpush1.msra.mxu0 0.0
    %130 = vmatprep.subr.mxu0 0.0
    %131 = vmatpush1.msra.mxu0 0.0
    %132 = vmatprep.subr.mxu0 0.0
    %133 = vmatpush1.msra.mxu0 0.0
    %134 = vmatprep.subr.mxu0 0.0
    %135 = vmatpush1.msra.mxu0 0.0
    %136 = vmatprep.subr.mxu0 0.0
    %137 = vmatpush1.msra.mxu0 0.0
    %138 = vmatprep.subr.mxu0 0.0
    %139 = vmatpush1.msra.mxu0 0.0
    %140 = vmatprep.subr.mxu0 0.0
    %141 = vmatpush1.msra.mxu0 0.0
    %142 = vmatprep.subr.mxu0 0.0
    %143 = vmatpush1.msra.mxu0 0.0
    %144 = vmatprep.subr.mxu0 0.0
    %145 = vmatpush1.msra.mxu0 0.0
    %146 = vmatprep.subr.mxu0 0.0
    %147 = vmatpush1.msra.mxu0 0.0
    %148 = vmatprep.subr.mxu0 0.0
    %149 = vmatpush1.msra.mxu0 0.0
    %150 = vmatprep.subr.mxu0 0.0
    %151 = vmatpush1.msra.mxu0 0.0
    %152 = vmatprep.subr.mxu0 0.0
    %153 = vmatpush1.msra.mxu0 0.0
    %154 = vmatprep.subr.mxu0 0.0
    %155 = vmatpush1.msra.mxu0 0.0
    %156 = vmatprep.subr.mxu0 0.0
    %157 = vmatpush1.msra.mxu0 0.0
    %158 = vmatprep.subr.mxu0 0.0
    %159 = vmatpush1.msra.mxu0 0.0
    %160 = vmatprep.subr.mxu0 0.0
    %161 = vmatpush1.msra.mxu0 0.0
    %162 = vmatprep.subr.mxu0 0.0
    %163 = vmatpush1.msra.mxu0 0.0
    %164 = vmatprep.mubr.f32.mxu0 0.0
    %165 = vmatmul.mubr.f32.gmra.mrb[0].mxu0 %v98
    %v166 = vpop.f32.mrb[0].mxu0
    %v167 = vadd.f32 %v94, %v166
    %v168 = vpop.f32.mrb[0].mxu0
    %v169 = vadd.f32 %v94, %v168
    %170 = vdwg.mxu0
    %171 = vmatprep.subr.mxu0 %v40
    %172 = vmatpush1.msra.mxu0 %v39
    %173 = vmatprep.subr.mxu0 %v66
    %174 = vmatpush1.msra.mxu0 %v65
    %175 = vmatprep.subr.mxu0 %v85
    %176 = vmatpush1.msra.mxu0 %v84
    %177 = vmatprep.subr.mxu0 0.0
    %178 = vmatpush1.msra.mxu0 0.0
    %179 = vmatprep.subr.mxu0 0.0
    %180 = vmatpush1.msra.mxu0 0.0
    %181 = vmatprep.subr.mxu0 0.0
    %182 = vmatpush1.msra.mxu0 0.0
    %183 = vmatprep.subr.mxu0 0.0
    %184 = vmatpush1.msra.mxu0 0.0
    %185 = vmatprep.subr.mxu0 0.0
    %186 = vmatpush1.msra.mxu0 0.0
    %187 = vmatprep.subr.mxu0 0.0
    %188 = vmatpush1.msra.mxu0 0.0
    %189 = vmatprep.subr.mxu0 0.0
    %190 = vmatpush1.msra.mxu0 0.0
    %191 = vmatprep.subr.mxu0 0.0
    %192 = vmatpush1.msra.mxu0 0.0
    %193 = vmatprep.subr.mxu0 0.0
    %194 = vmatpush1.msra.mxu0 0.0
    %195 = vmatprep.subr.mxu0 0.0
    %196 = vmatpush1.msra.mxu0 0.0
    %197 = vmatprep.subr.mxu0 0.0
    %198 = vmatpush1.msra.mxu0 0.0
    %199 = vmatprep.subr.mxu0 0.0
    %200 = vmatpush1.msra.mxu0 0.0
    %201 = vmatprep.subr.mxu0 0.0
    %202 = vmatpush1.msra.mxu0 0.0
    %203 = vmatprep.subr.mxu0 0.0
    %204 = vmatpush1.msra.mxu0 0.0
    %205 = vmatprep.subr.mxu0 0.0
    %206 = vmatpush1.msra.mxu0 0.0
    %207 = vmatprep.subr.mxu0 0.0
    %208 = vmatpush1.msra.mxu0 0.0
    %209 = vmatprep.subr.mxu0 0.0
    %210 = vmatpush1.msra.mxu0 0.0
    %211 = vmatprep.subr.mxu0 0.0
    %212 = vmatpush1.msra.mxu0 0.0
    %213 = vmatprep.subr.mxu0 0.0
    %214 = vmatpush1.msra.mxu0 0.0
    %215 = vmatprep.subr.mxu0 0.0
    %216 = vmatpush1.msra.mxu0 0.0
    %217 = vmatprep.subr.mxu0 0.0
    %218 = vmatpush1.msra.mxu0 0.0
    %219 = vmatprep.subr.mxu0 0.0
    %220 = vmatpush1.msra.mxu0 0.0
    %221 = vmatprep.subr.mxu0 0.0
    %222 = vmatpush1.msra.mxu0 0.0
    %223 = vmatprep.subr.mxu0 0.0
    %224 = vmatpush1.msra.mxu0 0.0
    %225 = vmatprep.subr.mxu0 0.0
    %226 = vmatpush1.msra.mxu0 0.0
    %227 = vmatprep.subr.mxu0 0.0
    %228 = vmatpush1.msra.mxu0 0.0
    %229 = vmatprep.subr.mxu0 0.0
    %230 = vmatpush1.msra.mxu0 0.0
    %231 = vmatprep.subr.mxu0 0.0
    %232 = vmatpush1.msra.mxu0 0.0
    %233 = vmatprep.subr.mxu0 0.0
    %234 = vmatpush1.msra.mxu0 0.0
    %235 = vmatprep.mubr.f32.mxu0 0.0
    %236 = vmatmul.mubr.f32.gmra.mrb[0].mxu0 %v98
    %v237 = vpop.f32.mrb[0].mxu0
    %v238 = vadd.f32 %v94, %v237
    %v239 = vpop.f32.mrb[0].mxu0
    %v240 = vadd.f32 %v94, %v239
    %241 = vdwg.mxu0
    %vm242 = vcmp.gt.f32.partialorder %v167, 0.0
    %vm243 = vcmp.gt.f32.partialorder %v169, 0.0
    %vm244 = vcmp.gt.f32.partialorder %v238, 0.0
    %vm245 = vcmp.gt.f32.partialorder %v240, 0.0
    %v246 = vmin.f32 %v167, 0.0
    %v247 = vmin.f32 %v169, 0.0
    %v248 = vmin.f32 %v238, 0.0
    %v249 = vmin.f32 %v240, 0.0
    %v250 = vmul.f32 %v246, 1.442695
    %v251 = vpow.pop %v250
    %v252 = vmul.f32 %v247, 1.442695
    %v253 = vpow.pop %v252
    %v254 = vmul.f32 %v248, 1.442695
    %v255 = vpow.pop %v254
    %v256 = vmul.f32 %v249, 1.442695
    %v257 = vpow.pop %v256
    %v258 = vsub.f32 %v251, 1.0
    %v259 = vsub.f32 %v253, 1.0
    %v260 = vsub.f32 %v255, 1.0
    %v261 = vsub.f32 %v257, 1.0
    %v262 = vsel %vm242, %v167, %v258
    %v263 = vsel %vm243, %v169, %v259
    %v264 = vsel %vm244, %v238, %v260
    %v265 = vsel %vm245, %v240, %v261
    %v266 = vld [vmem:[%s3] sm:$0xff]
    %v267 = vld [vmem:[%s4] sm:$0xff]
    %269 = vset.pattern.permute.xlu0 0
    %270 = vperm.xlu0 %269, %v267
    %v271 = vpop.permute.xlu0 %270
    %vm273 = vcmask 64512
    %v275 = vsel %vm273, %v266, 0
    %277 = vmatprep.subr.mxu0 %v263
    %278 = vmatpush1.msra.mxu0 %v262
    %279 = vmatprep.subr.mxu0 0.0
    %280 = vmatpush1.msra.mxu0 0.0
    %281 = vmatprep.subr.mxu0 0.0
    %282 = vmatpush1.msra.mxu0 0.0
    %283 = vmatprep.subr.mxu0 0.0
    %284 = vmatpush1.msra.mxu0 0.0
    %285 = vmatprep.subr.mxu0 0.0
    %286 = vmatpush1.msra.mxu0 0.0
    %287 = vmatprep.subr.mxu0 0.0
    %288 = vmatpush1.msra.mxu0 0.0
    %289 = vmatprep.subr.mxu0 0.0
    %290 = vmatpush1.msra.mxu0 0.0
    %291 = vmatprep.subr.mxu0 0.0
    %292 = vmatpush1.msra.mxu0 0.0
    %293 = vmatprep.subr.mxu0 0.0
    %294 = vmatpush1.msra.mxu0 0.0
    %295 = vmatprep.subr.mxu0 0.0
    %296 = vmatpush1.msra.mxu0 0.0
    %297 = vmatprep.subr.mxu0 0.0
    %298 = vmatpush1.msra.mxu0 0.0
    %299 = vmatprep.subr.mxu0 0.0
    %300 = vmatpush1.msra.mxu0 0.0
    %301 = vmatprep.subr.mxu0 0.0
    %302 = vmatpush1.msra.mxu0 0.0
    %303 = vmatprep.subr.mxu0 0.0
    %304 = vmatpush1.msra.mxu0 0.0
    %305 = vmatprep.subr.mxu0 0.0
    %306 = vmatpush1.msra.mxu0 0.0
    %307 = vmatprep.subr.mxu0 0.0
    %308 = vmatpush1.msra.mxu0 0.0
    %309 = vmatprep.subr.mxu0 0.0
    %310 = vmatpush1.msra.mxu0 0.0
    %311 = vmatprep.subr.mxu0 0.0
    %312 = vmatpush1.msra.mxu0 0.0
    %313 = vmatprep.subr.mxu0 0.0
    %314 = vmatpush1.msra.mxu0 0.0
    %315 = vmatprep.subr.mxu0 0.0
    %316 = vmatpush1.msra.mxu0 0.0
    %317 = vmatprep.subr.mxu0 0.0
    %318 = vmatpush1.msra.mxu0 0.0
    %319 = vmatprep.subr.mxu0 0.0
    %320 = vmatpush1.msra.mxu0 0.0
    %321 = vmatprep.subr.mxu0 0.0
    %322 = vmatpush1.msra.mxu0 0.0
    %323 = vmatprep.subr.mxu0 0.0
    %324 = vmatpush1.msra.mxu0 0.0
    %325 = vmatprep.subr.mxu0 0.0
    %326 = vmatpush1.msra.mxu0 0.0
    %327 = vmatprep.subr.mxu0 0.0
    %328 = vmatpush1.msra.mxu0 0.0
    %329 = vmatprep.subr.mxu0 0.0
    %330 = vmatpush1.msra.mxu0 0.0
    %331 = vmatprep.subr.mxu0 0.0
    %332 = vmatpush1.msra.mxu0 0.0
    %333 = vmatprep.subr.mxu0 0.0
    %334 = vmatpush1.msra.mxu0 0.0
    %335 = vmatprep.subr.mxu0 0.0
    %336 = vmatpush1.msra.mxu0 0.0
    %337 = vmatprep.subr.mxu0 0.0
    %338 = vmatpush1.msra.mxu0 0.0
    %339 = vmatprep.subr.mxu0 0.0
    %340 = vmatpush1.msra.mxu0 0.0
    %341 = vmatprep.mubr.f32.mxu0 0.0
    %342 = vmatmul.mubr.f32.gmra.mrb[0].mxu0 %v275
    %v343 = vpop.f32.mrb[0].mxu0
    %v344 = vadd.f32 %v271, %v343
    %v345 = vpop.f32.mrb[0].mxu0
    %v346 = vadd.f32 %v271, %v345
    %347 = vdwg.mxu0
    %348 = vmatprep.subr.mxu0 %v265
    %349 = vmatpush1.msra.mxu0 %v264
    %350 = vmatprep.subr.mxu0 0.0
    %351 = vmatpush1.msra.mxu0 0.0
    %352 = vmatprep.subr.mxu0 0.0
    %353 = vmatpush1.msra.mxu0 0.0
    %354 = vmatprep.subr.mxu0 0.0
    %355 = vmatpush1.msra.mxu0 0.0
    %356 = vmatprep.subr.mxu0 0.0
    %357 = vmatpush1.msra.mxu0 0.0
    %358 = vmatprep.subr.mxu0 0.0
    %359 = vmatpush1.msra.mxu0 0.0
    %360 = vmatprep.subr.mxu0 0.0
    %361 = vmatpush1.msra.mxu0 0.0
    %362 = vmatprep.subr.mxu0 0.0
    %363 = vmatpush1.msra.mxu0 0.0
    %364 = vmatprep.subr.mxu0 0.0
    %365 = vmatpush1.msra.mxu0 0.0
    %366 = vmatprep.subr.mxu0 0.0
    %367 = vmatpush1.msra.mxu0 0.0
    %368 = vmatprep.subr.mxu0 0.0
    %369 = vmatpush1.msra.mxu0 0.0
    %370 = vmatprep.subr.mxu0 0.0
    %371 = vmatpush1.msra.mxu0 0.0
    %372 = vmatprep.subr.mxu0 0.0
    %373 = vmatpush1.msra.mxu0 0.0
    %374 = vmatprep.subr.mxu0 0.0
    %375 = vmatpush1.msra.mxu0 0.0
    %376 = vmatprep.subr.mxu0 0.0
    %377 = vmatpush1.msra.mxu0 0.0
    %378 = vmatprep.subr.mxu0 0.0
    %379 = vmatpush1.msra.mxu0 0.0
    %380 = vmatprep.subr.mxu0 0.0
    %381 = vmatpush1.msra.mxu0 0.0
    %382 = vmatprep.subr.mxu0 0.0
    %383 = vmatpush1.msra.mxu0 0.0
    %384 = vmatprep.subr.mxu0 0.0
    %385 = vmatpush1.msra.mxu0 0.0
    %386 = vmatprep.subr.mxu0 0.0
    %387 = vmatpush1.msra.mxu0 0.0
    %388 = vmatprep.subr.mxu0 0.0
    %389 = vmatpush1.msra.mxu0 0.0
    %390 = vmatprep.subr.mxu0 0.0
    %391 = vmatpush1.msra.mxu0 0.0
    %392 = vmatprep.subr.mxu0 0.0
    %393 = vmatpush1.msra.mxu0 0.0
    %394 = vmatprep.subr.mxu0 0.0
    %395 = vmatpush1.msra.mxu0 0.0
    %396 = vmatprep.subr.mxu0 0.0
    %397 = vmatpush1.msra.mxu0 0.0
    %398 = vmatprep.subr.mxu0 0.0
    %399 = vmatpush1.msra.mxu0 0.0
    %400 = vmatprep.subr.mxu0 0.0
    %401 = vmatpush1.msra.mxu0 0.0
    %402 = vmatprep.subr.mxu0 0.0
    %403 = vmatpush1.msra.mxu0 0.0
    %404 = vmatprep.subr.mxu0 0.0
    %405 = vmatpush1.msra.mxu0 0.0
    %406 = vmatprep.subr.mxu0 0.0
    %407 = vmatpush1.msra.mxu0 0.0
    %408 = vmatprep.subr.mxu0 0.0
    %409 = vmatpush1.msra.mxu0 0.0
    %410 = vmatprep.subr.mxu0 0.0
    %411 = vmatpush1.msra.mxu0 0.0
    %412 = vmatprep.mubr.f32.mxu0 0.0
    %413 = vmatmul.mubr.f32.gmra.mrb[0].mxu0 %v275
    %v414 = vpop.f32.mrb[0].mxu0
    %v415 = vadd.f32 %v271, %v414
    %v416 = vpop.f32.mrb[0].mxu0
    %v417 = vadd.f32 %v271, %v416
    %418 = vdwg.mxu0
    %v419 = vadd.f32 %v37, %v344
    %v420 = vadd.f32 %v38, %v346
    %v421 = vadd.f32 %v39, %v415
    %v422 = vadd.f32 %v40, %v417
    %vm423 = vcmp.gt.f32.partialorder %v419, 0.0
    %vm424 = vcmp.gt.f32.partialorder %v420, 0.0
    %vm425 = vcmp.gt.f32.partialorder %v421, 0.0
    %vm426 = vcmp.gt.f32.partialorder %v422, 0.0
    %v427 = vmin.f32 %v419, 0.0
    %v428 = vmin.f32 %v420, 0.0
    %v429 = vmin.f32 %v421, 0.0
    %v430 = vmin.f32 %v422, 0.0
    %v431 = vmul.f32 %v427, 1.442695
    %v432 = vpow.pop %v431
    %v433 = vmul.f32 %v428, 1.442695
    %v434 = vpow.pop %v433
    %v435 = vmul.f32 %v429, 1.442695
    %v436 = vpow.pop %v435
    %v437 = vmul.f32 %v430, 1.442695
    %v438 = vpow.pop %v437
    %v439 = vsub.f32 %v432, 1.0
    %v440 = vsub.f32 %v434, 1.0
    %v441 = vsub.f32 %v436, 1.0
    %v442 = vsub.f32 %v438, 1.0
    %v443 = vsel %vm423, %v419, %v439
    %v444 = vsel %vm424, %v420, %v440
    %v445 = vsel %vm425, %v421, %v441
    %v446 = vsel %vm426, %v422, %v442
    %447 = vst [vmem:[#allocation2] sm:$0xff] %v443
    %448 = vst [vmem:[#allocation2 + $0x8] sm:$0xff] %v444
    %449 = vst [vmem:[#allocation2 + $0x10] sm:$0xff] %v445
    %450 = vst [vmem:[#allocation2 + $0x18] sm:$0xff] %v446
    %451 = vst [vmem:[#allocation2 + $0x8] sm:$0xff] 0.0
    %452 = vst [vmem:[#allocation2 + $0x18] sm:$0xff] 0.0
    %s453 = scalar_lea.vmem %s1, 8
    %v454 = vld [vmem:[%s453] sm:$0xff]
    %v455 = vld [vmem:[#allocation2] sm:$0xff]
    %v456 = vld [vmem:[#allocation2 + $0x8] sm:$0xff]
    %v457 = vld [vmem:[#allocation2 + $0x10] sm:$0xff]
    %v458 = vld [vmem:[#allocation2 + $0x18] sm:$0xff]
    %v459 = vld [vmem:[#allocation2 + $0x20] sm:$0xff]
    %465 = vrot.lane.b32.xlu0 %v455, 125
    %v466 = vpop.permute.xlu0 %465
    %467 = vrot.lane.b32.xlu0 %v456, 125
    %v468 = vpop.permute.xlu0 %467
    %469 = vrot.lane.b32.xlu0 %v457, 125
    %v470 = vpop.permute.xlu0 %469
    %471 = vrot.lane.b32.xlu0 %v458, 125
    %v472 = vpop.permute.xlu0 %471
    %473 = vrot.lane.b32.xlu0 %v459, 125
    %v474 = vpop.permute.xlu0 %473
    %vm475 = vcmask 1022976
    %v476 = vsel %vm475, %v466, %v468
    %v477 = vsel %vm475, %v468, %v470
    %v478 = vsel %vm475, %v470, %v472
    %v479 = vsel %vm475, %v472, %v474
    %484 = vrot.lane.b32.xlu0 %v455, 122
    %v485 = vpop.permute.xlu0 %484
    %486 = vrot.lane.b32.xlu0 %v456, 122
    %v487 = vpop.permute.xlu0 %486
    %488 = vrot.lane.b32.xlu0 %v457, 122
    %v489 = vpop.permute.xlu0 %488
    %490 = vrot.lane.b32.xlu0 %v458, 122
    %v491 = vpop.permute.xlu0 %490
    %492 = vrot.lane.b32.xlu0 %v459, 122
    %v493 = vpop.permute.xlu0 %492
    %vm494 = vcmask 998400
    %v495 = vsel %vm494, %v485, %v487
    %v496 = vsel %vm494, %v487, %v489
    %v497 = vsel %vm494, %v489, %v491
    %v498 = vsel %vm494, %v491, %v493
    %s503 = scalar_lea.vmem %s2, 8
    %v504 = vld [vmem:[%s503] sm:$0xff]
    %506 = vset.pattern.permute.xlu0 0
    %507 = vperm.xlu0 %506, %v504
    %v508 = vpop.permute.xlu0 %507
    %v511 = vsel %vm96, %v454, 0
    %513 = vmatprep.subr.mxu0 %v444
    %514 = vmatpush1.msra.mxu0 %v443
    %515 = vmatprep.subr.mxu0 %v477
    %516 = vmatpush1.msra.mxu0 %v476
    %517 = vmatprep.subr.mxu0 %v496
    %518 = vmatpush1.msra.mxu0 %v495
    %519 = vmatprep.subr.mxu0 0.0
    %520 = vmatpush1.msra.mxu0 0.0
    %521 = vmatprep.subr.mxu0 0.0
    %522 = vmatpush1.msra.mxu0 0.0
    %523 = vmatprep.subr.mxu0 0.0
    %524 = vmatpush1.msra.mxu0 0.0
    %525 = vmatprep.subr.mxu0 0.0
    %526 = vmatpush1.msra.mxu0 0.0
    %527 = vmatprep.subr.mxu0 0.0
    %528 = vmatpush1.msra.mxu0 0.0
    %529 = vmatprep.subr.mxu0 0.0
    %530 = vmatpush1.msra.mxu0 0.0
    %531 = vmatprep.subr.mxu0 0.0
    %532 = vmatpush1.msra.mxu0 0.0
    %533 = vmatprep.subr.mxu0 0.0
    %534 = vmatpush1.msra.mxu0 0.0
    %535 = vmatprep.subr.mxu0 0.0
    %536 = vmatpush1.msra.mxu0 0.0
    %537 = vmatprep.subr.mxu0 0.0
    %538 = vmatpush1.msra.mxu0 0.0
    %539 = vmatprep.subr.mxu0 0.0
    %540 = vmatpush1.msra.mxu0 0.0
    %541 = vmatprep.subr.mxu0 0.0
    %542 = vmatpush1.msra.mxu0 0.0
    %543 = vmatprep.subr.mxu0 0.0
    %544 = vmatpush1.msra.mxu0 0.0
    %545 = vmatprep.subr.mxu0 0.0
    %546 = vmatpush1.msra.mxu0 0.0
    %547 = vmatprep.subr.mxu0 0.0
    %548 = vmatpush1.msra.mxu0 0.0
    %549 = vmatprep.subr.mxu0 0.0
    %550 = vmatpush1.msra.mxu0 0.0
    %551 = vmatprep.subr.mxu0 0.0
    %552 = vmatpush1.msra.mxu0 0.0
    %553 = vmatprep.subr.mxu0 0.0
    %554 = vmatpush1.msra.mxu0 0.0
    %555 = vmatprep.subr.mxu0 0.0
    %556 = vmatpush1.msra.mxu0 0.0
    %557 = vmatprep.subr.mxu0 0.0
    %558 = vmatpush1.msra.mxu0 0.0
    %559 = vmatprep.subr.mxu0 0.0
    %560 = vmatpush1.msra.mxu0 0.0
    %561 = vmatprep.subr.mxu0 0.0
    %562 = vmatpush1.msra.mxu0 0.0
    %563 = vmatprep.subr.mxu0 0.0
    %564 = vmatpush1.msra.mxu0 0.0
    %565 = vmatprep.subr.mxu0 0.0
    %566 = vmatpush1.msra.mxu0 0.0
    %567 = vmatprep.subr.mxu0 0.0
    %568 = vmatpush1.msra.mxu0 0.0
    %569 = vmatprep.subr.mxu0 0.0
    %570 = vmatpush1.msra.mxu0 0.0
    %571 = vmatprep.subr.mxu0 0.0
    %572 = vmatpush1.msra.mxu0 0.0
    %573 = vmatprep.subr.mxu0 0.0
    %574 = vmatpush1.msra.mxu0 0.0
    %575 = vmatprep.subr.mxu0 0.0
    %576 = vmatpush1.msra.mxu0 0.0
    %577 = vmatprep.mubr.f32.mxu0 0.0
    %578 = vmatmul.mubr.f32.gmra.mrb[0].mxu0 %v511
    %v579 = vpop.f32.mrb[0].mxu0
    %v580 = vadd.f32 %v508, %v579
    %v581 = vpop.f32.mrb[0].mxu0
    %v582 = vadd.f32 %v508, %v581
    %583 = vdwg.mxu0
    %584 = vmatprep.subr.mxu0 %v446
    %585 = vmatpush1.msra.mxu0 %v445
    %586 = vmatprep.subr.mxu0 %v479
    %587 = vmatpush1.msra.mxu0 %v478
    %588 = vmatprep.subr.mxu0 %v498
    %589 = vmatpush1.msra.mxu0 %v497
    %590 = vmatprep.subr.mxu0 0.0
    %591 = vmatpush1.msra.mxu0 0.0
    %592 = vmatprep.subr.mxu0 0.0
    %593 = vmatpush1.msra.mxu0 0.0
    %594 = vmatprep.subr.mxu0 0.0
    %595 = vmatpush1.msra.mxu0 0.0
    %596 = vmatprep.subr.mxu0 0.0
    %597 = vmatpush1.msra.mxu0 0.0
    %598 = vmatprep.subr.mxu0 0.0
    %599 = vmatpush1.msra.mxu0 0.0
    %600 = vmatprep.subr.mxu0 0.0
    %601 = vmatpush1.msra.mxu0 0.0
    %602 = vmatprep.subr.mxu0 0.0
    %603 = vmatpush1.msra.mxu0 0.0
    %604 = vmatprep.subr.mxu0 0.0
    %605 = vmatpush1.msra.mxu0 0.0
    %606 = vmatprep.subr.mxu0 0.0
    %607 = vmatpush1.msra.mxu0 0.0
    %608 = vmatprep.subr.mxu0 0.0
    %609 = vmatpush1.msra.mxu0 0.0
    %610 = vmatprep.subr.mxu0 0.0
    %611 = vmatpush1.msra.mxu0 0.0
    %612 = vmatprep.subr.mxu0 0.0
    %613 = vmatpush1.msra.mxu0 0.0
    %614 = vmatprep.subr.mxu0 0.0
    %615 = vmatpush1.msra.mxu0 0.0
    %616 = vmatprep.subr.mxu0 0.0
    %617 = vmatpush1.msra.mxu0 0.0
    %618 = vmatprep.subr.mxu0 0.0
    %619 = vmatpush1.msra.mxu0 0.0
    %620 = vmatprep.subr.mxu0 0.0
    %621 = vmatpush1.msra.mxu0 0.0
    %622 = vmatprep.subr.mxu0 0.0
    %623 = vmatpush1.msra.mxu0 0.0
    %624 = vmatprep.subr.mxu0 0.0
    %625 = vmatpush1.msra.mxu0 0.0
    %626 = vmatprep.subr.mxu0 0.0
    %627 = vmatpush1.msra.mxu0 0.0
    %628 = vmatprep.subr.mxu0 0.0
    %629 = vmatpush1.msra.mxu0 0.0
    %630 = vmatprep.subr.mxu0 0.0
    %631 = vmatpush1.msra.mxu0 0.0
    %632 = vmatprep.subr.mxu0 0.0
    %633 = vmatpush1.msra.mxu0 0.0
    %634 = vmatprep.subr.mxu0 0.0
    %635 = vmatpush1.msra.mxu0 0.0
    %636 = vmatprep.subr.mxu0 0.0
    %637 = vmatpush1.msra.mxu0 0.0
    %638 = vmatprep.subr.mxu0 0.0
    %639 = vmatpush1.msra.mxu0 0.0
    %640 = vmatprep.subr.mxu0 0.0
    %641 = vmatpush1.msra.mxu0 0.0
    %642 = vmatprep.subr.mxu0 0.0
    %643 = vmatpush1.msra.mxu0 0.0
    %644 = vmatprep.subr.mxu0 0.0
    %645 = vmatpush1.msra.mxu0 0.0
    %646 = vmatprep.subr.mxu0 0.0
    %647 = vmatpush1.msra.mxu0 0.0
    %648 = vmatprep.mubr.f32.mxu0 0.0
    %649 = vmatmul.mubr.f32.gmra.mrb[0].mxu0 %v511
    %v650 = vpop.f32.mrb[0].mxu0
    %v651 = vadd.f32 %v508, %v650
    %v652 = vpop.f32.mrb[0].mxu0
    %v653 = vadd.f32 %v508, %v652
    %654 = vdwg.mxu0
    %vm655 = vcmp.gt.f32.partialorder %v580, 0.0
    %vm656 = vcmp.gt.f32.partialorder %v582, 0.0
    %vm657 = vcmp.gt.f32.partialorder %v651, 0.0
    %vm658 = vcmp.gt.f32.partialorder %v653, 0.0
    %v659 = vmin.f32 %v580, 0.0
    %v660 = vmin.f32 %v582, 0.0
    %v661 = vmin.f32 %v651, 0.0
    %v662 = vmin.f32 %v653, 0.0
    %v663 = vmul.f32 %v659, 1.442695
    %v664 = vpow.pop %v663
    %v665 = vmul.f32 %v660, 1.442695
    %v666 = vpow.pop %v665
    %v667 = vmul.f32 %v661, 1.442695
    %v668 = vpow.pop %v667
    %v669 = vmul.f32 %v662, 1.442695
    %v670 = vpow.pop %v669
    %v671 = vsub.f32 %v664, 1.0
    %v672 = vsub.f32 %v666, 1.0
    %v673 = vsub.f32 %v668, 1.0
    %v674 = vsub.f32 %v670, 1.0
    %v675 = vsel %vm655, %v580, %v671
    %v676 = vsel %vm656, %v582, %v672
    %v677 = vsel %vm657, %v651, %v673
    %v678 = vsel %vm658, %v653, %v674
    %s679 = scalar_lea.vmem %s3, 8
    %v680 = vld [vmem:[%s679] sm:$0xff]
    %s681 = scalar_lea.vmem %s4, 8
    %v682 = vld [vmem:[%s681] sm:$0xff]
    %684 = vset.pattern.permute.xlu0 0
    %685 = vperm.xlu0 %684, %v682
    %v686 = vpop.permute.xlu0 %685
    %v689 = vsel %vm273, %v680, 0
    %691 = vmatprep.subr.mxu0 %v676
    %692 = vmatpush1.msra.mxu0 %v675
    %693 = vmatprep.subr.mxu0 0.0
    %694 = vmatpush1.msra.mxu0 0.0
    %695 = vmatprep.subr.mxu0 0.0
    %696 = vmatpush1.msra.mxu0 0.0
    %697 = vmatprep.subr.mxu0 0.0
    %698 = vmatpush1.msra.mxu0 0.0
    %699 = vmatprep.subr.mxu0 0.0
    %700 = vmatpush1.msra.mxu0 0.0
    %701 = vmatprep.subr.mxu0 0.0
    %702 = vmatpush1.msra.mxu0 0.0
    %703 = vmatprep.subr.mxu0 0.0
    %704 = vmatpush1.msra.mxu0 0.0
    %705 = vmatprep.subr.mxu0 0.0
    %706 = vmatpush1.msra.mxu0 0.0
    %707 = vmatprep.subr.mxu0 0.0
    %708 = vmatpush1.msra.mxu0 0.0
    %709 = vmatprep.subr.mxu0 0.0
    %710 = vmatpush1.msra.mxu0 0.0
    %711 = vmatprep.subr.mxu0 0.0
    %712 = vmatpush1.msra.mxu0 0.0
    %713 = vmatprep.subr.mxu0 0.0
    %714 = vmatpush1.msra.mxu0 0.0
    %715 = vmatprep.subr.mxu0 0.0
    %716 = vmatpush1.msra.mxu0 0.0
    %717 = vmatprep.subr.mxu0 0.0
    %718 = vmatpush1.msra.mxu0 0.0
    %719 = vmatprep.subr.mxu0 0.0
    %720 = vmatpush1.msra.mxu0 0.0
    %721 = vmatprep.subr.mxu0 0.0
    %722 = vmatpush1.msra.mxu0 0.0
    %723 = vmatprep.subr.mxu0 0.0
    %724 = vmatpush1.msra.mxu0 0.0
    %725 = vmatprep.subr.mxu0 0.0
    %726 = vmatpush1.msra.mxu0 0.0
    %727 = vmatprep.subr.mxu0 0.0
    %728 = vmatpush1.msra.mxu0 0.0
    %729 = vmatprep.subr.mxu0 0.0
    %730 = vmatpush1.msra.mxu0 0.0
    %731 = vmatprep.subr.mxu0 0.0
    %732 = vmatpush1.msra.mxu0 0.0
    %733 = vmatprep.subr.mxu0 0.0
    %734 = vmatpush1.msra.mxu0 0.0
    %735 = vmatprep.subr.mxu0 0.0
    %736 = vmatpush1.msra.mxu0 0.0
    %737 = vmatprep.subr.mxu0 0.0
    %738 = vmatpush1.msra.mxu0 0.0
    %739 = vmatprep.subr.mxu0 0.0
    %740 = vmatpush1.msra.mxu0 0.0
    %741 = vmatprep.subr.mxu0 0.0
    %742 = vmatpush1.msra.mxu0 0.0
    %743 = vmatprep.subr.mxu0 0.0
    %744 = vmatpush1.msra.mxu0 0.0
    %745 = vmatprep.subr.mxu0 0.0
    %746 = vmatpush1.msra.mxu0 0.0
    %747 = vmatprep.subr.mxu0 0.0
    %748 = vmatpush1.msra.mxu0 0.0
    %749 = vmatprep.subr.mxu0 0.0
    %750 = vmatpush1.msra.mxu0 0.0
    %751 = vmatprep.subr.mxu0 0.0
    %752 = vmatpush1.msra.mxu0 0.0
    %753 = vmatprep.subr.mxu0 0.0
    %754 = vmatpush1.msra.mxu0 0.0
    %755 = vmatprep.mubr.f32.mxu0 0.0
    %756 = vmatmul.mubr.f32.gmra.mrb[0].mxu0 %v689
    %v757 = vpop.f32.mrb[0].mxu0
    %v758 = vadd.f32 %v686, %v757
    %v759 = vpop.f32.mrb[0].mxu0
    %v760 = vadd.f32 %v686, %v759
    %761 = vdwg.mxu0
    %762 = vmatprep.subr.mxu0 %v678
    %763 = vmatpush1.msra.mxu0 %v677
    %764 = vmatprep.subr.mxu0 0.0
    %765 = vmatpush1.msra.mxu0 0.0
    %766 = vmatprep.subr.mxu0 0.0
    %767 = vmatpush1.msra.mxu0 0.0
    %768 = vmatprep.subr.mxu0 0.0
    %769 = vmatpush1.msra.mxu0 0.0
    %770 = vmatprep.subr.mxu0 0.0
    %771 = vmatpush1.msra.mxu0 0.0
    %772 = vmatprep.subr.mxu0 0.0
    %773 = vmatpush1.msra.mxu0 0.0
    %774 = vmatprep.subr.mxu0 0.0
    %775 = vmatpush1.msra.mxu0 0.0
    %776 = vmatprep.subr.mxu0 0.0
    %777 = vmatpush1.msra.mxu0 0.0
    %778 = vmatprep.subr.mxu0 0.0
    %779 = vmatpush1.msra.mxu0 0.0
    %780 = vmatprep.subr.mxu0 0.0
    %781 = vmatpush1.msra.mxu0 0.0
    %782 = vmatprep.subr.mxu0 0.0
    %783 = vmatpush1.msra.mxu0 0.0
    %784 = vmatprep.subr.mxu0 0.0
    %785 = vmatpush1.msra.mxu0 0.0
    %786 = vmatprep.subr.mxu0 0.0
    %787 = vmatpush1.msra.mxu0 0.0
    %788 = vmatprep.subr.mxu0 0.0
    %789 = vmatpush1.msra.mxu0 0.0
    %790 = vmatprep.subr.mxu0 0.0
    %791 = vmatpush1.msra.mxu0 0.0
    %792 = vmatprep.subr.mxu0 0.0
    %793 = vmatpush1.msra.mxu0 0.0
    %794 = vmatprep.subr.mxu0 0.0
    %795 = vmatpush1.msra.mxu0 0.0
    %796 = vmatprep.subr.mxu0 0.0
    %797 = vmatpush1.msra.mxu0 0.0
    %798 = vmatprep.subr.mxu0 0.0
    %799 = vmatpush1.msra.mxu0 0.0
    %800 = vmatprep.subr.mxu0 0.0
    %801 = vmatpush1.msra.mxu0 0.0
    %802 = vmatprep.subr.mxu0 0.0
    %803 = vmatpush1.msra.mxu0 0.0
    %804 = vmatprep.subr.mxu0 0.0
    %805 = vmatpush1.msra.mxu0 0.0
    %806 = vmatprep.subr.mxu0 0.0
    %807 = vmatpush1.msra.mxu0 0.0
    %808 = vmatprep.subr.mxu0 0.0
    %809 = vmatpush1.msra.mxu0 0.0
    %810 = vmatprep.subr.mxu0 0.0
    %811 = vmatpush1.msra.mxu0 0.0
    %812 = vmatprep.subr.mxu0 0.0
    %813 = vmatpush1.msra.mxu0 0.0
    %814 = vmatprep.subr.mxu0 0.0
    %815 = vmatpush1.msra.mxu0 0.0
    %816 = vmatprep.subr.mxu0 0.0
    %817 = vmatpush1.msra.mxu0 0.0
    %818 = vmatprep.subr.mxu0 0.0
    %819 = vmatpush1.msra.mxu0 0.0
    %820 = vmatprep.subr.mxu0 0.0
    %821 = vmatpush1.msra.mxu0 0.0
    %822 = vmatprep.subr.mxu0 0.0
    %823 = vmatpush1.msra.mxu0 0.0
    %824 = vmatprep.subr.mxu0 0.0
    %825 = vmatpush1.msra.mxu0 0.0
    %826 = vmatprep.mubr.f32.mxu0 0.0
    %827 = vmatmul.mubr.f32.gmra.mrb[0].mxu0 %v689
    %v828 = vpop.f32.mrb[0].mxu0
    %v829 = vadd.f32 %v686, %v828
    %v830 = vpop.f32.mrb[0].mxu0
    %v831 = vadd.f32 %v686, %v830
    %832 = vdwg.mxu0
    %v833 = vadd.f32 %v443, %v758
    %v834 = vadd.f32 %v444, %v760
    %v835 = vadd.f32 %v445, %v829
    %v836 = vadd.f32 %v446, %v831
    %vm837 = vcmp.gt.f32.partialorder %v833, 0.0
    %vm838 = vcmp.gt.f32.partialorder %v834, 0.0
    %vm839 = vcmp.gt.f32.partialorder %v835, 0.0
    %vm840 = vcmp.gt.f32.partialorder %v836, 0.0
    %v841 = vmin.f32 %v833, 0.0
    %v842 = vmin.f32 %v834, 0.0
    %v843 = vmin.f32 %v835, 0.0
    %v844 = vmin.f32 %v836, 0.0
    %v845 = vmul.f32 %v841, 1.442695
    %v846 = vpow.pop %v845
    %v847 = vmul.f32 %v842, 1.442695
    %v848 = vpow.pop %v847
    %v849 = vmul.f32 %v843, 1.442695
    %v850 = vpow.pop %v849
    %v851 = vmul.f32 %v844, 1.442695
    %v852 = vpow.pop %v851
    %v853 = vsub.f32 %v846, 1.0
    %v854 = vsub.f32 %v848, 1.0
    %v855 = vsub.f32 %v850, 1.0
    %v856 = vsub.f32 %v852, 1.0
    %v857 = vsel %vm837, %v833, %v853
    %v858 = vsel %vm838, %v834, %v854
    %v859 = vsel %vm839, %v835, %v855
    %v860 = vsel %vm840, %v836, %v856
    %861 = vst [vmem:[#allocation2] sm:$0xff] %v857
    %862 = vst [vmem:[#allocation2 + $0x8] sm:$0xff] %v858
    %863 = vst [vmem:[#allocation2 + $0x10] sm:$0xff] %v859
    %864 = vst [vmem:[#allocation2 + $0x18] sm:$0xff] %v860
    %865 = vst [vmem:[#allocation2 + $0x8] sm:$0xff] 0.0
    %866 = vst [vmem:[#allocation2 + $0x18] sm:$0xff] 0.0
    %s867 = scalar_lea.vmem %s1, 16
    %v868 = vld [vmem:[%s867] sm:$0xff]
    %v869 = vld [vmem:[#allocation2] sm:$0xff]
    %v870 = vld [vmem:[#allocation2 + $0x8] sm:$0xff]
    %v871 = vld [vmem:[#allocation2 + $0x10] sm:$0xff]
    %v872 = vld [vmem:[#allocation2 + $0x18] sm:$0xff]
    %v873 = vld [vmem:[#allocation2 + $0x20] sm:$0xff]
    %879 = vrot.lane.b32.xlu0 %v869, 123
    %v880 = vpop.permute.xlu0 %879
    %881 = vrot.lane.b32.xlu0 %v870, 123
    %v882 = vpop.permute.xlu0 %881
    %883 = vrot.lane.b32.xlu0 %v871, 123
    %v884 = vpop.permute.xlu0 %883
    %885 = vrot.lane.b32.xlu0 %v872, 123
    %v886 = vpop.permute.xlu0 %885
    %887 = vrot.lane.b32.xlu0 %v873, 123
    %v888 = vpop.permute.xlu0 %887
    %vm889 = vcmask 1006592
    %v890 = vsel %vm889, %v880, %v882
    %v891 = vsel %vm889, %v882, %v884
    %v892 = vsel %vm889, %v884, %v886
    %v893 = vsel %vm889, %v886, %v888
    %898 = vrot.lane.b32.xlu0 %v869, 118
    %v899 = vpop.permute.xlu0 %898
    %900 = vrot.lane.b32.xlu0 %v870, 118
    %v901 = vpop.permute.xlu0 %900
    %902 = vrot.lane.b32.xlu0 %v871, 118
    %v903 = vpop.permute.xlu0 %902
    %904 = vrot.lane.b32.xlu0 %v872, 118
    %v905 = vpop.permute.xlu0 %904
    %906 = vrot.lane.b32.xlu0 %v873, 118
    %v907 = vpop.permute.xlu0 %906
    %vm908 = vcmask 965632
    %v909 = vsel %vm908, %v899, %v901
    %v910 = vsel %vm908, %v901, %v903
    %v911 = vsel %vm908, %v903, %v905
    %v912 = vsel %vm908, %v905, %v907
    %s917 = scalar_lea.vmem %s2, 16
    %v918 = vld [vmem:[%s917] sm:$0xff]
    %920 = vset.pattern.permute.xlu0 0
    %921 = vperm.xlu0 %920, %v918
    %v922 = vpop.permute.xlu0 %921
    %v925 = vsel %vm96, %v868, 0
    %927 = vmatprep.subr.mxu0 %v858
    %928 = vmatpush1.msra.mxu0 %v857
    %929 = vmatprep.subr.mxu0 %v891
    %930 = vmatpush1.msra.mxu0 %v890
    %931 = vmatprep.subr.mxu0 %v910
    %932 = vmatpush1.msra.mxu0 %v909
    %933 = vmatprep.subr.mxu0 0.0
    %934 = vmatpush1.msra.mxu0 0.0
    %935 = vmatprep.subr.mxu0 0.0
    %936 = vmatpush1.msra.mxu0 0.0
    %937 = vmatprep.subr.mxu0 0.0
    %938 = vmatpush1.msra.mxu0 0.0
    %939 = vmatprep.subr.mxu0 0.0
    %940 = vmatpush1.msra.mxu0 0.0
    %941 = vmatprep.subr.mxu0 0.0
    %942 = vmatpush1.msra.mxu0 0.0
    %943 = vmatprep.subr.mxu0 0.0
    %944 = vmatpush1.msra.mxu0 0.0
    %945 = vmatprep.subr.mxu0 0.0
    %946 = vmatpush1.msra.mxu0 0.0
    %947 = vmatprep.subr.mxu0 0.0
    %948 = vmatpush1.msra.mxu0 0.0
    %949 = vmatprep.subr.mxu0 0.0
    %950 = vmatpush1.msra.mxu0 0.0
    %951 = vmatprep.subr.mxu0 0.0
    %952 = vmatpush1.msra.mxu0 0.0
    %953 = vmatprep.subr.mxu0 0.0
    %954 = vmatpush1.msra.mxu0 0.0
    %955 = vmatprep.subr.mxu0 0.0
    %956 = vmatpush1.msra.mxu0 0.0
    %957 = vmatprep.subr.mxu0 0.0
    %958 = vmatpush1.msra.mxu0 0.0
    %959 = vmatprep.subr.mxu0 0.0
    %960 = vmatpush1.msra.mxu0 0.0
    %961 = vmatprep.subr.mxu0 0.0
    %962 = vmatpush1.msra.mxu0 0.0
    %963 = vmatprep.subr.mxu0 0.0
    %964 = vmatpush1.msra.mxu0 0.0
    %965 = vmatprep.subr.mxu0 0.0
    %966 = vmatpush1.msra.mxu0 0.0
    %967 = vmatprep.subr.mxu0 0.0
    %968 = vmatpush1.msra.mxu0 0.0
    %969 = vmatprep.subr.mxu0 0.0
    %970 = vmatpush1.msra.mxu0 0.0
    %971 = vmatprep.subr.mxu0 0.0
    %972 = vmatpush1.msra.mxu0 0.0
    %973 = vmatprep.subr.mxu0 0.0
    %974 = vmatpush1.msra.mxu0 0.0
    %975 = vmatprep.subr.mxu0 0.0
    %976 = vmatpush1.msra.mxu0 0.0
    %977 = vmatprep.subr.mxu0 0.0
    %978 = vmatpush1.msra.mxu0 0.0
    %979 = vmatprep.subr.mxu0 0.0
    %980 = vmatpush1.msra.mxu0 0.0
    %981 = vmatprep.subr.mxu0 0.0
    %982 = vmatpush1.msra.mxu0 0.0
    %983 = vmatprep.subr.mxu0 0.0
    %984 = vmatpush1.msra.mxu0 0.0
    %985 = vmatprep.subr.mxu0 0.0
    %986 = vmatpush1.msra.mxu0 0.0
    %987 = vmatprep.subr.mxu0 0.0
    %988 = vmatpush1.msra.mxu0 0.0
    %989 = vmatprep.subr.mxu0 0.0
    %990 = vmatpush1.msra.mxu0 0.0
    %991 = vmatprep.mubr.f32.mxu0 0.0
    %992 = vmatmul.mubr.f32.gmra.mrb[0].mxu0 %v925
    %v993 = vpop.f32.mrb[0].mxu0
    %v994 = vadd.f32 %v922, %v993
    %v995 = vpop.f32.mrb[0].mxu0
    %v996 = vadd.f32 %v922, %v995
    %997 = vdwg.mxu0
    %998 = vmatprep.subr.mxu0 %v860
    %999 = vmatpush1.msra.mxu0 %v859
    %1000 = vmatprep.subr.mxu0 %v893
    %1001 = vmatpush1.msra.mxu0 %v892
    %1002 = vmatprep.subr.mxu0 %v912
    %1003 = vmatpush1.msra.mxu0 %v911
    %1004 = vmatprep.subr.mxu0 0.0
    %1005 = vmatpush1.msra.mxu0 0.0
    %1006 = vmatprep.subr.mxu0 0.0
    %1007 = vmatpush1.msra.mxu0 0.0
    %1008 = vmatprep.subr.mxu0 0.0
    %1009 = vmatpush1.msra.mxu0 0.0
    %1010 = vmatprep.subr.mxu0 0.0
    %1011 = vmatpush1.msra.mxu0 0.0
    %1012 = vmatprep.subr.mxu0 0.0
    %1013 = vmatpush1.msra.mxu0 0.0
    %1014 = vmatprep.subr.mxu0 0.0
    %1015 = vmatpush1.msra.mxu0 0.0
    %1016 = vmatprep.subr.mxu0 0.0
    %1017 = vmatpush1.msra.mxu0 0.0
    %1018 = vmatprep.subr.mxu0 0.0
    %1019 = vmatpush1.msra.mxu0 0.0
    %1020 = vmatprep.subr.mxu0 0.0
    %1021 = vmatpush1.msra.mxu0 0.0
    %1022 = vmatprep.subr.mxu0 0.0
    %1023 = vmatpush1.msra.mxu0 0.0
    %1024 = vmatprep.subr.mxu0 0.0
    %1025 = vmatpush1.msra.mxu0 0.0
    %1026 = vmatprep.subr.mxu0 0.0
    %1027 = vmatpush1.msra.mxu0 0.0
    %1028 = vmatprep.subr.mxu0 0.0
    %1029 = vmatpush1.msra.mxu0 0.0
    %1030 = vmatprep.subr.mxu0 0.0
    %1031 = vmatpush1.msra.mxu0 0.0
    %1032 = vmatprep.subr.mxu0 0.0
    %1033 = vmatpush1.msra.mxu0 0.0
    %1034 = vmatprep.subr.mxu0 0.0
    %1035 = vmatpush1.msra.mxu0 0.0
    %1036 = vmatprep.subr.mxu0 0.0
    %1037 = vmatpush1.msra.mxu0 0.0
    %1038 = vmatprep.subr.mxu0 0.0
    %1039 = vmatpush1.msra.mxu0 0.0
    %1040 = vmatprep.subr.mxu0 0.0
    %1041 = vmatpush1.msra.mxu0 0.0
    %1042 = vmatprep.subr.mxu0 0.0
    %1043 = vmatpush1.msra.mxu0 0.0
    %1044 = vmatprep.subr.mxu0 0.0
    %1045 = vmatpush1.msra.mxu0 0.0
    %1046 = vmatprep.subr.mxu0 0.0
    %1047 = vmatpush1.msra.mxu0 0.0
    %1048 = vmatprep.subr.mxu0 0.0
    %1049 = vmatpush1.msra.mxu0 0.0
    %1050 = vmatprep.subr.mxu0 0.0
    %1051 = vmatpush1.msra.mxu0 0.0
    %1052 = vmatprep.subr.mxu0 0.0
    %1053 = vmatpush1.msra.mxu0 0.0
    %1054 = vmatprep.subr.mxu0 0.0
    %1055 = vmatpush1.msra.mxu0 0.0
    %1056 = vmatprep.subr.mxu0 0.0
    %1057 = vmatpush1.msra.mxu0 0.0
    %1058 = vmatprep.subr.mxu0 0.0
    %1059 = vmatpush1.msra.mxu0 0.0
    %1060 = vmatprep.subr.mxu0 0.0
    %1061 = vmatpush1.msra.mxu0 0.0
    %1062 = vmatprep.mubr.f32.mxu0 0.0
    %1063 = vmatmul.mubr.f32.gmra.mrb[0].mxu0 %v925
    %v1064 = vpop.f32.mrb[0].mxu0
    %v1065 = vadd.f32 %v922, %v1064
    %v1066 = vpop.f32.mrb[0].mxu0
    %v1067 = vadd.f32 %v922, %v1066
    %1068 = vdwg.mxu0
    %vm1069 = vcmp.gt.f32.partialorder %v994, 0.0
    %vm1070 = vcmp.gt.f32.partialorder %v996, 0.0
    %vm1071 = vcmp.gt.f32.partialorder %v1065, 0.0
    %vm1072 = vcmp.gt.f32.partialorder %v1067, 0.0
    %v1073 = vmin.f32 %v994, 0.0
    %v1074 = vmin.f32 %v996, 0.0
    %v1075 = vmin.f32 %v1065, 0.0
    %v1076 = vmin.f32 %v1067, 0.0
    %v1077 = vmul.f32 %v1073, 1.442695
    %v1078 = vpow.pop %v1077
    %v1079 = vmul.f32 %v1074, 1.442695
    %v1080 = vpow.pop %v1079
    %v1081 = vmul.f32 %v1075, 1.442695
    %v1082 = vpow.pop %v1081
    %v1083 = vmul.f32 %v1076, 1.442695
    %v1084 = vpow.pop %v1083
    %v1085 = vsub.f32 %v1078, 1.0
    %v1086 = vsub.f32 %v1080, 1.0
    %v1087 = vsub.f32 %v1082, 1.0
    %v1088 = vsub.f32 %v1084, 1.0
    %v1089 = vsel %vm1069, %v994, %v1085
    %v1090 = vsel %vm1070, %v996, %v1086
    %v1091 = vsel %vm1071, %v1065, %v1087
    %v1092 = vsel %vm1072, %v1067, %v1088
    %s1093 = scalar_lea.vmem %s3, 16
    %v1094 = vld [vmem:[%s1093] sm:$0xff]
    %s1095 = scalar_lea.vmem %s4, 16
    %v1096 = vld [vmem:[%s1095] sm:$0xff]
    %1098 = vset.pattern.permute.xlu0 0
    %1099 = vperm.xlu0 %1098, %v1096
    %v1100 = vpop.permute.xlu0 %1099
    %v1103 = vsel %vm273, %v1094, 0
    %1105 = vmatprep.subr.mxu0 %v1090
    %1106 = vmatpush1.msra.mxu0 %v1089
    %1107 = vmatprep.subr.mxu0 0.0
    %1108 = vmatpush1.msra.mxu0 0.0
    %1109 = vmatprep.subr.mxu0 0.0
    %1110 = vmatpush1.msra.mxu0 0.0
    %1111 = vmatprep.subr.mxu0 0.0
    %1112 = vmatpush1.msra.mxu0 0.0
    %1113 = vmatprep.subr.mxu0 0.0
    %1114 = vmatpush1.msra.mxu0 0.0
    %1115 = vmatprep.subr.mxu0 0.0
    %1116 = vmatpush1.msra.mxu0 0.0
    %1117 = vmatprep.subr.mxu0 0.0
    %1118 = vmatpush1.msra.mxu0 0.0
    %1119 = vmatprep.subr.mxu0 0.0
    %1120 = vmatpush1.msra.mxu0 0.0
    %1121 = vmatprep.subr.mxu0 0.0
    %1122 = vmatpush1.msra.mxu0 0.0
    %1123 = vmatprep.subr.mxu0 0.0
    %1124 = vmatpush1.msra.mxu0 0.0
    %1125 = vmatprep.subr.mxu0 0.0
    %1126 = vmatpush1.msra.mxu0 0.0
    %1127 = vmatprep.subr.mxu0 0.0
    %1128 = vmatpush1.msra.mxu0 0.0
    %1129 = vmatprep.subr.mxu0 0.0
    %1130 = vmatpush1.msra.mxu0 0.0
    %1131 = vmatprep.subr.mxu0 0.0
    %1132 = vmatpush1.msra.mxu0 0.0
    %1133 = vmatprep.subr.mxu0 0.0
    %1134 = vmatpush1.msra.mxu0 0.0
    %1135 = vmatprep.subr.mxu0 0.0
    %1136 = vmatpush1.msra.mxu0 0.0
    %1137 = vmatprep.subr.mxu0 0.0
    %1138 = vmatpush1.msra.mxu0 0.0
    %1139 = vmatprep.subr.mxu0 0.0
    %1140 = vmatpush1.msra.mxu0 0.0
    %1141 = vmatprep.subr.mxu0 0.0
    %1142 = vmatpush1.msra.mxu0 0.0
    %1143 = vmatprep.subr.mxu0 0.0
    %1144 = vmatpush1.msra.mxu0 0.0
    %1145 = vmatprep.subr.mxu0 0.0
    %1146 = vmatpush1.msra.mxu0 0.0
    %1147 = vmatprep.subr.mxu0 0.0
    %1148 = vmatpush1.msra.mxu0 0.0
    %1149 = vmatprep.subr.mxu0 0.0
    %1150 = vmatpush1.msra.mxu0 0.0
    %1151 = vmatprep.subr.mxu0 0.0
    %1152 = vmatpush1.msra.mxu0 0.0
    %1153 = vmatprep.subr.mxu0 0.0
    %1154 = vmatpush1.msra.mxu0 0.0
    %1155 = vmatprep.subr.mxu0 0.0
    %1156 = vmatpush1.msra.mxu0 0.0
    %1157 = vmatprep.subr.mxu0 0.0
    %1158 = vmatpush1.msra.mxu0 0.0
    %1159 = vmatprep.subr.mxu0 0.0
    %1160 = vmatpush1.msra.mxu0 0.0
    %1161 = vmatprep.subr.mxu0 0.0
    %1162 = vmatpush1.msra.mxu0 0.0
    %1163 = vmatprep.subr.mxu0 0.0
    %1164 = vmatpush1.msra.mxu0 0.0
    %1165 = vmatprep.subr.mxu0 0.0
    %1166 = vmatpush1.msra.mxu0 0.0
    %1167 = vmatprep.subr.mxu0 0.0
    %1168 = vmatpush1.msra.mxu0 0.0
    %1169 = vmatprep.mubr.f32.mxu0 0.0
    %1170 = vmatmul.mubr.f32.gmra.mrb[0].mxu0 %v1103
    %v1171 = vpop.f32.mrb[0].mxu0
    %v1172 = vadd.f32 %v1100, %v1171
    %v1173 = vpop.f32.mrb[0].mxu0
    %v1174 = vadd.f32 %v1100, %v1173
    %1175 = vdwg.mxu0
    %1176 = vmatprep.subr.mxu0 %v1092
    %1177 = vmatpush1.msra.mxu0 %v1091
    %1178 = vmatprep.subr.mxu0 0.0
    %1179 = vmatpush1.msra.mxu0 0.0
    %1180 = vmatprep.subr.mxu0 0.0
    %1181 = vmatpush1.msra.mxu0 0.0
    %1182 = vmatprep.subr.mxu0 0.0
    %1183 = vmatpush1.msra.mxu0 0.0
    %1184 = vmatprep.subr.mxu0 0.0
    %1185 = vmatpush1.msra.mxu0 0.0
    %1186 = vmatprep.subr.mxu0 0.0
    %1187 = vmatpush1.msra.mxu0 0.0
    %1188 = vmatprep.subr.mxu0 0.0
    %1189 = vmatpush1.msra.mxu0 0.0
    %1190 = vmatprep.subr.mxu0 0.0
    %1191 = vmatpush1.msra.mxu0 0.0
    %1192 = vmatprep.subr.mxu0 0.0
    %1193 = vmatpush1.msra.mxu0 0.0
    %1194 = vmatprep.subr.mxu0 0.0
    %1195 = vmatpush1.msra.mxu0 0.0
    %1196 = vmatprep.subr.mxu0 0.0
    %1197 = vmatpush1.msra.mxu0 0.0
    %1198 = vmatprep.subr.mxu0 0.0
    %1199 = vmatpush1.msra.mxu0 0.0
    %1200 = vmatprep.subr.mxu0 0.0
    %1201 = vmatpush1.msra.mxu0 0.0
    %1202 = vmatprep.subr.mxu0 0.0
    %1203 = vmatpush1.msra.mxu0 0.0
    %1204 = vmatprep.subr.mxu0 0.0
    %1205 = vmatpush1.msra.mxu0 0.0
    %1206 = vmatprep.subr.mxu0 0.0
    %1207 = vmatpush1.msra.mxu0 0.0
    %1208 = vmatprep.subr.mxu0 0.0
    %1209 = vmatpush1.msra.mxu0 0.0
    %1210 = vmatprep.subr.mxu0 0.0
    %1211 = vmatpush1.msra.mxu0 0.0
    %1212 = vmatprep.subr.mxu0 0.0
    %1213 = vmatpush1.msra.mxu0 0.0
    %1214 = vmatprep.subr.mxu0 0.0
    %1215 = vmatpush1.msra.mxu0 0.0
    %1216 = vmatprep.subr.mxu0 0.0
    %1217 = vmatpush1.msra.mxu0 0.0
    %1218 = vmatprep.subr.mxu0 0.0
    %1219 = vmatpush1.msra.mxu0 0.0
    %1220 = vmatprep.subr.mxu0 0.0
    %1221 = vmatpush1.msra.mxu0 0.0
    %1222 = vmatprep.subr.mxu0 0.0
    %1223 = vmatpush1.msra.mxu0 0.0
    %1224 = vmatprep.subr.mxu0 0.0
    %1225 = vmatpush1.msra.mxu0 0.0
    %1226 = vmatprep.subr.mxu0 0.0
    %1227 = vmatpush1.msra.mxu0 0.0
    %1228 = vmatprep.subr.mxu0 0.0
    %1229 = vmatpush1.msra.mxu0 0.0
    %1230 = vmatprep.subr.mxu0 0.0
    %1231 = vmatpush1.msra.mxu0 0.0
    %1232 = vmatprep.subr.mxu0 0.0
    %1233 = vmatpush1.msra.mxu0 0.0
    %1234 = vmatprep.subr.mxu0 0.0
    %1235 = vmatpush1.msra.mxu0 0.0
    %1236 = vmatprep.subr.mxu0 0.0
    %1237 = vmatpush1.msra.mxu0 0.0
    %1238 = vmatprep.subr.mxu0 0.0
    %1239 = vmatpush1.msra.mxu0 0.0
    %1240 = vmatprep.mubr.f32.mxu0 0.0
    %1241 = vmatmul.mubr.f32.gmra.mrb[0].mxu0 %v1103
    %v1242 = vpop.f32.mrb[0].mxu0
    %v1243 = vadd.f32 %v1100, %v1242
    %v1244 = vpop.f32.mrb[0].mxu0
    %v1245 = vadd.f32 %v1100, %v1244
    %1246 = vdwg.mxu0
    %v1247 = vadd.f32 %v857, %v1172
    %v1248 = vadd.f32 %v858, %v1174
    %v1249 = vadd.f32 %v859, %v1243
    %v1250 = vadd.f32 %v860, %v1245
    %vm1251 = vcmp.gt.f32.partialorder %v1247, 0.0
    %vm1252 = vcmp.gt.f32.partialorder %v1248, 0.0
    %vm1253 = vcmp.gt.f32.partialorder %v1249, 0.0
    %vm1254 = vcmp.gt.f32.partialorder %v1250, 0.0
    %v1255 = vmin.f32 %v1247, 0.0
    %v1256 = vmin.f32 %v1248, 0.0
    %v1257 = vmin.f32 %v1249, 0.0
    %v1258 = vmin.f32 %v1250, 0.0
    %v1259 = vmul.f32 %v1255, 1.442695
    %v1260 = vpow.pop %v1259
    %v1261 = vmul.f32 %v1256, 1.442695
    %v1262 = vpow.pop %v1261
    %v1263 = vmul.f32 %v1257, 1.442695
    %v1264 = vpow.pop %v1263
    %v1265 = vmul.f32 %v1258, 1.442695
    %v1266 = vpow.pop %v1265
    %v1267 = vsub.f32 %v1260, 1.0
    %v1268 = vsub.f32 %v1262, 1.0
    %v1269 = vsub.f32 %v1264, 1.0
    %v1270 = vsub.f32 %v1266, 1.0
    %v1271 = vsel %vm1251, %v1247, %v1267
    %v1272 = vsel %vm1252, %v1248, %v1268
    %v1273 = vsel %vm1253, %v1249, %v1269
    %v1274 = vsel %vm1254, %v1250, %v1270
    %1275 = vst [vmem:[#allocation2] sm:$0xff] %v1271
    %1276 = vst [vmem:[#allocation2 + $0x8] sm:$0xff] %v1272
    %1277 = vst [vmem:[#allocation2 + $0x10] sm:$0xff] %v1273
    %1278 = vst [vmem:[#allocation2 + $0x18] sm:$0xff] %v1274
    %1279 = vst [vmem:[#allocation2 + $0x8] sm:$0xff] 0.0
    %1280 = vst [vmem:[#allocation2 + $0x18] sm:$0xff] 0.0
    %v1281 = vld [vmem:[%s5] sm:$0xff]
    %v1282 = vld [vmem:[%s5 + $0x8] sm:$0xff]
    %v1283 = vld [vmem:[#allocation2] sm:$0xff]
    %v1284 = vld [vmem:[#allocation2 + $0x8] sm:$0xff]
    %v1285 = vld [vmem:[#allocation2 + $0x10] sm:$0xff]
    %v1286 = vld [vmem:[#allocation2 + $0x18] sm:$0xff]
    %v1287 = vld [vmem:[#allocation2 + $0x20] sm:$0xff]
    %1293 = vrot.lane.b32.xlu0 %v1283, 127
    %v1294 = vpop.permute.xlu0 %1293
    %1295 = vrot.lane.b32.xlu0 %v1284, 127
    %v1296 = vpop.permute.xlu0 %1295
    %1297 = vrot.lane.b32.xlu0 %v1285, 127
    %v1298 = vpop.permute.xlu0 %1297
    %1299 = vrot.lane.b32.xlu0 %v1286, 127
    %v1300 = vpop.permute.xlu0 %1299
    %1301 = vrot.lane.b32.xlu0 %v1287, 127
    %v1302 = vpop.permute.xlu0 %1301
    %v1303 = vsel %vm62, %v1294, %v1296
    %v1304 = vsel %vm62, %v1296, %v1298
    %v1305 = vsel %vm62, %v1298, %v1300
    %v1306 = vsel %vm62, %v1300, %v1302
    %1311 = vrot.lane.b32.xlu0 %v1283, 126
    %v1312 = vpop.permute.xlu0 %1311
    %1313 = vrot.lane.b32.xlu0 %v1284, 126
    %v1314 = vpop.permute.xlu0 %1313
    %1315 = vrot.lane.b32.xlu0 %v1285, 126
    %v1316 = vpop.permute.xlu0 %1315
    %1317 = vrot.lane.b32.xlu0 %v1286, 126
    %v1318 = vpop.permute.xlu0 %1317
    %1319 = vrot.lane.b32.xlu0 %v1287, 126
    %v1320 = vpop.permute.xlu0 %1319
    %v1321 = vsel %vm81, %v1312, %v1314
    %v1322 = vsel %vm81, %v1314, %v1316
    %v1323 = vsel %vm81, %v1316, %v1318
    %v1324 = vsel %vm81, %v1318, %v1320
    %1329 = vrot.lane.b32.xlu0 %v1283, 125
    %v1330 = vpop.permute.xlu0 %1329
    %1331 = vrot.lane.b32.xlu0 %v1284, 125
    %v1332 = vpop.permute.xlu0 %1331
    %1333 = vrot.lane.b32.xlu0 %v1285, 125
    %v1334 = vpop.permute.xlu0 %1333
    %1335 = vrot.lane.b32.xlu0 %v1286, 125
    %v1336 = vpop.permute.xlu0 %1335
    %1337 = vrot.lane.b32.xlu0 %v1287, 125
    %v1338 = vpop.permute.xlu0 %1337
    %v1339 = vsel %vm475, %v1330, %v1332
    %v1340 = vsel %vm475, %v1332, %v1334
    %v1341 = vsel %vm475, %v1334, %v1336
    %v1342 = vsel %vm475, %v1336, %v1338
    %v1347 = vld [vmem:[%s6] sm:$0xff]
    %v1348 = vld [vmem:[%s6 + $0x8] sm:$0xff]
    %1350 = vset.pattern.permute.xlu0 0
    %1351 = vperm.xlu0 %1350, %v1347
    %v1352 = vpop.permute.xlu0 %1351
    %1355 = vset.pattern.permute.xlu0 0
    %1356 = vperm.xlu0 %1355, %v1348
    %v1357 = vpop.permute.xlu0 %1356
    %vm1359 = vcmask 261120
    %v1361 = vsel %vm1359, %v1281, 0
    %v1364 = vsel %vm1359, %v1282, 0
    %1366 = vmatprep.subr.mxu0 %v1272
    %1367 = vmatpush1.msra.mxu0 %v1271
    %1368 = vmatprep.subr.mxu0 %v1304
    %1369 = vmatpush1.msra.mxu0 %v1303
    %1370 = vmatprep.subr.mxu0 %v1322
    %1371 = vmatpush1.msra.mxu0 %v1321
    %1372 = vmatprep.subr.mxu0 %v1340
    %1373 = vmatpush1.msra.mxu0 %v1339
    %1374 = vmatprep.subr.mxu0 0.0
    %1375 = vmatpush1.msra.mxu0 0.0
    %1376 = vmatprep.subr.mxu0 0.0
    %1377 = vmatpush1.msra.mxu0 0.0
    %1378 = vmatprep.subr.mxu0 0.0
    %1379 = vmatpush1.msra.mxu0 0.0
    %1380 = vmatprep.subr.mxu0 0.0
    %1381 = vmatpush1.msra.mxu0 0.0
    %1382 = vmatprep.subr.mxu0 0.0
    %1383 = vmatpush1.msra.mxu0 0.0
    %1384 = vmatprep.subr.mxu0 0.0
    %1385 = vmatpush1.msra.mxu0 0.0
    %1386 = vmatprep.subr.mxu0 0.0
    %1387 = vmatpush1.msra.mxu0 0.0
    %1388 = vmatprep.subr.mxu0 0.0
    %1389 = vmatpush1.msra.mxu0 0.0
    %1390 = vmatprep.subr.mxu0 0.0
    %1391 = vmatpush1.msra.mxu0 0.0
    %1392 = vmatprep.subr.mxu0 0.0
    %1393 = vmatpush1.msra.mxu0 0.0
    %1394 = vmatprep.subr.mxu0 0.0
    %1395 = vmatpush1.msra.mxu0 0.0
    %1396 = vmatprep.subr.mxu0 0.0
    %1397 = vmatpush1.msra.mxu0 0.0
    %1398 = vmatprep.subr.mxu0 0.0
    %1399 = vmatpush1.msra.mxu0 0.0
    %1400 = vmatprep.subr.mxu0 0.0
    %1401 = vmatpush1.msra.mxu0 0.0
    %1402 = vmatprep.subr.mxu0 0.0
    %1403 = vmatpush1.msra.mxu0 0.0
    %1404 = vmatprep.subr.mxu0 0.0
    %1405 = vmatpush1.msra.mxu0 0.0
    %1406 = vmatprep.subr.mxu0 0.0
    %1407 = vmatpush1.msra.mxu0 0.0
    %1408 = vmatprep.subr.mxu0 0.0
    %1409 = vmatpush1.msra.mxu0 0.0
    %1410 = vmatprep.subr.mxu0 0.0
    %1411 = vmatpush1.msra.mxu0 0.0
    %1412 = vmatprep.subr.mxu0 0.0
    %1413 = vmatpush1.msra.mxu0 0.0
    %1414 = vmatprep.subr.mxu0 0.0
    %1415 = vmatpush1.msra.mxu0 0.0
    %1416 = vmatprep.subr.mxu0 0.0
    %1417 = vmatpush1.msra.mxu0 0.0
    %1418 = vmatprep.subr.mxu0 0.0
    %1419 = vmatpush1.msra.mxu0 0.0
    %1420 = vmatprep.subr.mxu0 0.0
    %1421 = vmatpush1.msra.mxu0 0.0
    %1422 = vmatprep.subr.mxu0 0.0
    %1423 = vmatpush1.msra.mxu0 0.0
    %1424 = vmatprep.subr.mxu0 0.0
    %1425 = vmatpush1.msra.mxu0 0.0
    %1426 = vmatprep.subr.mxu0 0.0
    %1427 = vmatpush1.msra.mxu0 0.0
    %1428 = vmatprep.subr.mxu0 0.0
    %1429 = vmatpush1.msra.mxu0 0.0
    %1430 = vmatprep.mubr.f32.mxu0 0.0
    %1431 = vmatmul.mubr.f32.gmra.mrb[0].mxu0 %v1361
    %v1432 = vpop.f32.mrb[0].mxu0
    %v1433 = vadd.f32 %v1352, %v1432
    %v1434 = vpop.f32.mrb[0].mxu0
    %1435 = vmatprep.mubr.f32.mxu0 0.0
    %1436 = vmatmul.mubr.f32.gmra.mrb[0].mxu0 %v1364
    %v1437 = vpop.f32.mrb[0].mxu0
    %v1438 = vadd.f32 %v1357, %v1437
    %v1439 = vpop.f32.mrb[0].mxu0
    %1440 = vdwg.mxu0
    %1441 = vmatprep.subr.mxu0 %v1274
    %1442 = vmatpush1.msra.mxu0 %v1273
    %1443 = vmatprep.subr.mxu0 %v1306
    %1444 = vmatpush1.msra.mxu0 %v1305
    %1445 = vmatprep.subr.mxu0 %v1324
    %1446 = vmatpush1.msra.mxu0 %v1323
    %1447 = vmatprep.subr.mxu0 %v1342
    %1448 = vmatpush1.msra.mxu0 %v1341
    %1449 = vmatprep.subr.mxu0 0.0
    %1450 = vmatpush1.msra.mxu0 0.0
    %1451 = vmatprep.subr.mxu0 0.0
    %1452 = vmatpush1.msra.mxu0 0.0
    %1453 = vmatprep.subr.mxu0 0.0
    %1454 = vmatpush1.msra.mxu0 0.0
    %1455 = vmatprep.subr.mxu0 0.0
    %1456 = vmatpush1.msra.mxu0 0.0
    %1457 = vmatprep.subr.mxu0 0.0
    %1458 = vmatpush1.msra.mxu0 0.0
    %1459 = vmatprep.subr.mxu0 0.0
    %1460 = vmatpush1.msra.mxu0 0.0
    %1461 = vmatprep.subr.mxu0 0.0
    %1462 = vmatpush1.msra.mxu0 0.0
    %1463 = vmatprep.subr.mxu0 0.0
    %1464 = vmatpush1.msra.mxu0 0.0
    %1465 = vmatprep.subr.mxu0 0.0
    %1466 = vmatpush1.msra.mxu0 0.0
    %1467 = vmatprep.subr.mxu0 0.0
    %1468 = vmatpush1.msra.mxu0 0.0
    %1469 = vmatprep.subr.mxu0 0.0
    %1470 = vmatpush1.msra.mxu0 0.0
    %1471 = vmatprep.subr.mxu0 0.0
    %1472 = vmatpush1.msra.mxu0 0.0
    %1473 = vmatprep.subr.mxu0 0.0
    %1474 = vmatpush1.msra.mxu0 0.0
    %1475 = vmatprep.subr.mxu0 0.0
    %1476 = vmatpush1.msra.mxu0 0.0
    %1477 = vmatprep.subr.mxu0 0.0
    %1478 = vmatpush1.msra.mxu0 0.0
    %1479 = vmatprep.subr.mxu0 0.0
    %1480 = vmatpush1.msra.mxu0 0.0
    %1481 = vmatprep.subr.mxu0 0.0
    %1482 = vmatpush1.msra.mxu0 0.0
    %1483 = vmatprep.subr.mxu0 0.0
    %1484 = vmatpush1.msra.mxu0 0.0
    %1485 = vmatprep.subr.mxu0 0.0
    %1486 = vmatpush1.msra.mxu0 0.0
    %1487 = vmatprep.subr.mxu0 0.0
    %1488 = vmatpush1.msra.mxu0 0.0
    %1489 = vmatprep.subr.mxu0 0.0
    %1490 = vmatpush1.msra.mxu0 0.0
    %1491 = vmatprep.subr.mxu0 0.0
    %1492 = vmatpush1.msra.mxu0 0.0
    %1493 = vmatprep.subr.mxu0 0.0
    %1494 = vmatpush1.msra.mxu0 0.0
    %1495 = vmatprep.subr.mxu0 0.0
    %1496 = vmatpush1.msra.mxu0 0.0
    %1497 = vmatprep.subr.mxu0 0.0
    %1498 = vmatpush1.msra.mxu0 0.0
    %1499 = vmatprep.subr.mxu0 0.0
    %1500 = vmatpush1.msra.mxu0 0.0
    %1501 = vmatprep.subr.mxu0 0.0
    %1502 = vmatpush1.msra.mxu0 0.0
    %1503 = vmatprep.subr.mxu0 0.0
    %1504 = vmatpush1.msra.mxu0 0.0
    %1505 = vmatprep.mubr.f32.mxu0 0.0
    %1506 = vmatmul.mubr.f32.gmra.mrb[0].mxu0 %v1361
    %v1507 = vpop.f32.mrb[0].mxu0
    %v1508 = vadd.f32 %v1352, %v1507
    %v1509 = vpop.f32.mrb[0].mxu0
    %1510 = vmatprep.mubr.f32.mxu0 0.0
    %1511 = vmatmul.mubr.f32.gmra.mrb[0].mxu0 %v1364
    %v1512 = vpop.f32.mrb[0].mxu0
    %v1513 = vadd.f32 %v1357, %v1512
    %v1514 = vpop.f32.mrb[0].mxu0
    %1515 = vdwg.mxu0
    %1516 = vst [vmem:[#allocation3] sm:$0xff] %v1433
    %1517 = vst [vmem:[#allocation3 + $0x8] sm:$0xff] %v1438
    %s1518 = scalar_lea.vmem [#allocation3], 16
    %1519 = vst [vmem:[%s1518] sm:$0xff] %v1508
    %1520 = vst [vmem:[%s1518 + $0x8] sm:$0xff] %v1513
    // Predicated region
    $region30: #{tpu_custom_call.1} parent=1 // pred_check
      _
    $region31: #{tpu_custom_call.1} parent=1 // pred_check_branch
      %1522 = sbr.rel (0) target = $region33
    $region32: #{tpu_custom_call.1} parent=1 // pred_region
      %s1524 = ssub.s32 512, 512
      %1525 = vsyncadd [#allocation4], %s1524
      %s1526 = sshll.u32 [#allocation3], 4
      %s1527 = int_to_ptr.vmem [resolvable:$true] %s1526
      %1532 = dma.vmem_to_hbm [thread:$0]  %s1527, 512, %s7, [#allocation4], 128, 128, 8
    $region33: #{tpu_custom_call.1} parent=1 // pred_fallthru
      _
    // Predicated region
    $region34: #{tpu_custom_call.1} parent=1 // pred_check
      _
    $region35: #{tpu_custom_call.1} parent=1 // pred_check_branch
      %1534 = sbr.rel (0) target = $region37
    $region36: #{tpu_custom_call.1} parent=1 // pred_region
      %1535 = dma.done [#allocation4], 512
    $region37: #{tpu_custom_call.1} parent=1 // pred_fallthru
      _
    %1536 = vsyncpa [#allocation4], 1

</llo_original>
